<compile_context>
chip_gen: v5e
topology: v5e:2x2
jax: 0.10.0
libtpu: 0.0.40
codegen_flags: <defaults>
</compile_context>

<pallas_src>
import jax
import jax.numpy as jnp
from jax.experimental import pallas as pl
from jax.experimental.pallas import tpu as pltpu


_TB_WORKING_SET_BUDGET = 20 * 1024 * 1024   # VMEM bytes budgeted for blocks + temporaries
_VMEM_LIMIT_BYTES = 40 * 1024 * 1024        # explicit scoped-VMEM limit (safe on v5e/v6e/v7x)


def _pick_batch_tile(batch, per_sample_bytes, budget_bytes):
    """Largest batch tile that (a) divides the batch, (b) is a multiple of 8
    (sublane rule for the 2-D x block) or the full batch, and (c) fits the VMEM
    working-set budget.  Prefers >= 2 grid steps (v7x has 2 TensorCores) when
    that does not break (a)/(b)."""
    cap = max(1, int(budget_bytes // max(per_sample_bytes, 1)))
    cands = [d for d in range(1, batch + 1)
             if batch % d == 0 and (d % 8 == 0 or d == batch)]
    fitting = [d for d in cands if d <= cap]
    tb = max(fitting) if fitting else min(cands)
    if tb == batch and batch >= 16:          # leave work for the second TC on v7x
        halves = [d for d in cands if d <= batch // 2]
        if halves:
            tb = max(halves)
    return tb


def bam_forward(x, params, *, out_dtype=jnp.bfloat16, batch_tile=None,
                dense_layout=False):
    B, C, H, W = x.shape
    HW = H * W
    CHW = C * HW
    F = params["wql"].shape[1]
    out_bytes = jnp.dtype(out_dtype).itemsize

    # --- host-side parameter folding (all algebraically exact) -------------
    # Fold the C->1 conv weights into the HW->F linear weights and fuse q/k.
    wq = (params["wqc"].reshape(C, 1, 1) * params["wql"][None]).reshape(CHW, F)
    wk = (params["wkc"].reshape(C, 1, 1) * params["wkl"][None]).reshape(CHW, F)
    w_qk = jnp.concatenate([wq, wk], axis=1)                       # (CHW, 2F)
    # Fold the conv biases into the linear biases:
    #   (map + b_conv) @ W + b_lin == map @ W + (b_conv * sum(W, 0) + b_lin)
    b_q = params["bqc"][0, 0] * jnp.sum(params["wql"], axis=0) + params["bql"][0]
    b_k = params["bkc"][0, 0] * jnp.sum(params["wkl"], axis=0) + params["bkl"][0]
    b_qk = jnp.concatenate([b_q, b_k], axis=0).reshape(1, 2 * F)   # (1, 2F)
    # s_conv: per-channel scale via SMEM; its bias is softmax-invariant -> dropped.
    ws = params["wsc"].reshape(C).astype(jnp.float32)              # (C,)

    x2 = x.reshape(B, CHW)                                         # free reshape

    # --- batch tile sized against the VMEM working set ---------------------
    per_sample = (2 * CHW * 4                    # double-buffered x block (f32)
                  + 2 * F * C * F * out_bytes    # double-buffered out block
                  + (3 + C) * F * F * 4)         # live f32 temps (att, exp, concat)
    TB = batch_tile if batch_tile is not None else _pick_batch_tile(
        B, per_sample, _TB_WORKING_SET_BUDGET)
    assert B % TB == 0, "batch tile must divide batch"

    def kernel(x_ref, w_ref, b_ref, ws_ref, out_ref):
        # q and k in one fused MXU matmul: (TB, C*HW) @ (C*HW, 2F).
        qk = jnp.dot(x_ref[...], w_ref[...],
                     preferred_element_type=jnp.float32) + b_ref[...]
        q = qk[:, :F]                                    # (TB, F)
        k = qk[:, F:]                                    # (TB, F)
        # Outer product on the VPU (a K=1 matmul would waste the MXU).
        att = q[:, :, None] * k[:, None, :]              # (TB, F, F) f32
        # Per-channel softmax keeps temporaries at (TB, F, F), not (TB, C, F, F).
        pieces = []
        for c in range(C):                               # static unroll, C is small
            scaled = att * ws_ref[c]                     # SMEM scalar * vreg
            m = jnp.max(scaled, axis=-1, keepdims=True)
            e = jnp.exp(scaled - m)
            denom = jnp.sum(e, axis=-1, keepdims=True)
            pieces.append(e * pl.reciprocal(denom, approx=False))  # exact rows-sum-to-1
        # Lane-dense output tile: last dim C*F (=128 for C=4, F=32) -> single
        # unmasked full-width store, dense HBM writeback.
        out_ref[...] = jnp.concatenate(pieces, axis=-1).astype(out_ref.dtype)

    grid = (B // TB,)
    cost = pl.CostEstimate(
        flops=int(2 * B * CHW * 2 * F + 2 * B * F * F + 6 * B * C * F * F),
        transcendentals=int(B * C * F * F),
        bytes_accessed=int(B * CHW * 4 + CHW * 2 * F * 4 + 2 * F * 4
                           + B * F * C * F * out_bytes),
    )

    y = pl.pallas_call(
        kernel,
        out_shape=jax.ShapeDtypeStruct((B, F, C * F), out_dtype),
        grid=grid,
        in_specs=[
            pl.BlockSpec((TB, CHW), lambda b: (b, 0)),           # x, TB samples / step
            pl.BlockSpec((CHW, 2 * F), lambda b: (0, 0)),        # fused q/k weights
            pl.BlockSpec((1, 2 * F), lambda b: (0, 0)),          # fused effective biases
            pl.BlockSpec(memory_space=pltpu.MemorySpace.SMEM),   # per-channel s_conv scale
        ],
        out_specs=pl.BlockSpec((TB, F, C * F), lambda b: (b, 0, 0)),
        compiler_params=pltpu.CompilerParams(
            dimension_semantics=("parallel",),
            vmem_limit_bytes=_VMEM_LIMIT_BYTES,
        ),
        cost_estimate=cost,
    )(x2, w_qk, b_qk, ws)

    if dense_layout:
        # Lane-dense layout: y[b, i, c*F + j] == att[b, c, i, j].
        return y
    # Module-semantic layout (B, C, F, F): free reshape + one XLA transpose outside
    # the kernel.
    return y.reshape(B, F, C, F).transpose(0, 2, 1, 3)


def bam_reference(x, p):
    """Pure-JAX reference matching the PyTorch forward semantics (biases unfolded)."""
    B, C, H, W = x.shape
    HW = H * W
    xf = x.reshape(B, C, HW)
    q_map = jnp.einsum("oc,bcn->bn", p["wqc"], xf) + p["bqc"][0, 0]   # (B, HW)
    k_map = jnp.einsum("oc,bcn->bn", p["wkc"], xf) + p["bkc"][0, 0]   # (B, HW)
    q = q_map @ p["wql"] + p["bql"][0]                                # (B, F)
    k = k_map @ p["wkl"] + p["bkl"][0]                                # (B, F)
    att = q[:, :, None] * k[:, None, :]                               # (B, F, F)
    out = att[:, None, :, :] * p["wsc"].reshape(1, C, 1, 1) + p["bsc"].reshape(1, C, 1, 1)
    return jax.nn.softmax(out, axis=-1)


def init_params(key, in_dim, in_feature, out_feature):
    ks = jax.random.split(key, 10)
    scale = 0.1
    return {
        # query_conv: Conv2d(in_dim -> 1, k=1)  weight (1, C), bias scalar as (1, 1)
        "wqc": scale * jax.random.normal(ks[0], (1, in_dim), jnp.float32),
        "bqc": scale * jax.random.normal(ks[1], (1, 1), jnp.float32),
        # key_conv
        "wkc": scale * jax.random.normal(ks[2], (1, in_dim), jnp.float32),
        "bkc": scale * jax.random.normal(ks[3], (1, 1), jnp.float32),
        # query_line: Linear(in_feature -> out_feature), stored pre-transposed (HW, F)
        "wql": scale * jax.random.normal(ks[4], (in_feature, out_feature), jnp.float32),
        "bql": scale * jax.random.normal(ks[5], (1, out_feature), jnp.float32),
        # key_line
        "wkl": scale * jax.random.normal(ks[6], (in_feature, out_feature), jnp.float32),
        "bkl": scale * jax.random.normal(ks[7], (1, out_feature), jnp.float32),
        # s_conv: Conv2d(1 -> in_dim, k=1)  weight (C, 1), bias (C, 1)
        "wsc": scale * jax.random.normal(ks[8], (in_dim, 1), jnp.float32),
        "bsc": scale * jax.random.normal(ks[9], (in_dim, 1), jnp.float32),
    }


if __name__ == "__main__":
    B, C, H, W = 2, 4, 16, 16           # in_dim=4
    in_feature = H * W                  # 256
    out_feature = 32                    # F

    key = jax.random.PRNGKey(0)
    kx, kp = jax.random.split(key)
    x = jax.random.normal(kx, (B, C, H, W), jnp.float32)
    params = init_params(kp, C, in_feature, out_feature)

    ref = jax.block_until_ready(bam_reference(x, params))

    # 1) f32 output: tight check of the math (bias folding, fused matmul, exact softmax).
    out_f32 = jax.block_until_ready(bam_forward(x, params, out_dtype=jnp.float32))
    assert out_f32.shape == (B, C, out_feature, out_feature)
    assert jnp.allclose(out_f32, ref, atol=1e-4, rtol=1e-4), "f32 mismatch vs reference"

    # 2) default bf16 output (halves HBM writeback): loose check for the quantized cast.
    out_bf16 = jax.block_until_ready(bam_forward(x, params))
    assert out_bf16.dtype == jnp.bfloat16
    assert out_bf16.shape == (B, C, out_feature, out_feature)
    assert jnp.allclose(out_bf16.astype(jnp.float32), ref, atol=1e-2, rtol=5e-2), \
        "bf16 mismatch vs reference"

    print("KERNEL_OK")
</pallas_src>

<mosaic_0001>
module attributes {stable_mosaic.version = 11 : i64} {
  func.func @kernel(%arg0: i32, %arg1: memref<2x1024xf32, #tpu.memory_space<vmem>>, %arg2: memref<1024x64xf32, #tpu.memory_space<vmem>>, %arg3: memref<1x64xf32, #tpu.memory_space<vmem>>, %arg4: memref<4xf32, #tpu.memory_space<smem>>, %arg5: memref<2x32x128xf32, #tpu.memory_space<vmem>>) attributes {dimension_semantics = [#tpu.dimension_semantics<parallel>], iteration_bounds = array<i64: 1>, scalar_prefetch = 0 : i64, scratch_operands = 0 : i64, tpu.core_type = #tpu.core_type<tc>, window_params = [{transform_indices = @transform_0, window_bounds = array<i64: 2, 1024>}, {pipeline_mode = #tpu.pipeline_mode<synchronous>, transform_indices = @transform_1, window_bounds = array<i64: 1024, 64>}, {pipeline_mode = #tpu.pipeline_mode<synchronous>, transform_indices = @transform_2, window_bounds = array<i64: 1, 64>}, {transform_indices = @transform_3, window_bounds = array<i64: 4>}, {transform_indices = @transform_4, window_bounds = array<i64: 2, 32, 128>}]} {
    %c0 = arith.constant 0 : index
    %c0_0 = arith.constant 0 : index
    %0 = vector.load %arg1[%c0, %c0_0] : memref<2x1024xf32, #tpu.memory_space<vmem>>, vector<2x1024xf32>
    %c0_1 = arith.constant 0 : index
    %c0_2 = arith.constant 0 : index
    %1 = vector.load %arg2[%c0_1, %c0_2] : memref<1024x64xf32, #tpu.memory_space<vmem>>, vector<1024x64xf32>
    %cst = arith.constant dense<0.000000e+00> : vector<2x64xf32>
    %2 = tpu.matmul %0, %1, %cst {dimension_numbers = #tpu.dot_dimension_numbers<[1], [0], [0], [1], [0, 0, 1, 1], [], []>} : vector<2x1024xf32>, vector<1024x64xf32>, vector<2x64xf32> -> vector<2x64xf32>
    %c0_3 = arith.constant 0 : index
    %c0_4 = arith.constant 0 : index
    %3 = vector.load %arg3[%c0_3, %c0_4] : memref<1x64xf32, #tpu.memory_space<vmem>>, vector<1x64xf32>
    %4 = vector.broadcast %3 : vector<1x64xf32> to vector<2x64xf32>
    %5 = arith.addf %2, %4 : vector<2x64xf32>
    %6 = vector.extract_strided_slice %5 {offsets = [0, 0], sizes = [2, 32], strides = [1, 1]} : vector<2x64xf32> to vector<2x32xf32>
    %7 = vector.extract_strided_slice %5 {offsets = [0, 32], sizes = [2, 32], strides = [1, 1]} : vector<2x64xf32> to vector<2x32xf32>
    %8 = vector.shape_cast %6 : vector<2x32xf32> to vector<2x32x1xf32>
    %9 = vector.shape_cast %7 : vector<2x32xf32> to vector<2x1x32xf32>
    %10 = vector.broadcast %8 : vector<2x32x1xf32> to vector<2x32x32xf32>
    %11 = vector.broadcast %9 : vector<2x1x32xf32> to vector<2x32x32xf32>
    %12 = arith.mulf %10, %11 : vector<2x32x32xf32>
    %c0_5 = arith.constant 0 : index
    %13 = memref.load %arg4[%c0_5] : memref<4xf32, #tpu.memory_space<smem>>
    %14 = vector.broadcast %13 : f32 to vector<2x32x32xf32>
    %15 = arith.mulf %12, %14 : vector<2x32x32xf32>
    %cst_6 = arith.constant dense<0xFF800000> : vector<2x32xf32>
    %16 = vector.multi_reduction <maximumf>, %15, %cst_6 [2] : vector<2x32x32xf32> to vector<2x32xf32>
    %17 = vector.shape_cast %16 : vector<2x32xf32> to vector<2x32x1xf32>
    %18 = vector.broadcast %17 : vector<2x32x1xf32> to vector<2x32x32xf32>
    %19 = arith.subf %15, %18 : vector<2x32x32xf32>
    %20 = math.exp %19 : vector<2x32x32xf32>
    %cst_7 = arith.constant dense<0.000000e+00> : vector<2x32xf32>
    %21 = vector.multi_reduction <add>, %20, %cst_7 [2] : vector<2x32x32xf32> to vector<2x32xf32>
    %22 = vector.shape_cast %21 : vector<2x32xf32> to vector<2x32x1xf32>
    %23 = tpu.reciprocal %22 : vector<2x32x1xf32> -> vector<2x32x1xf32>
    %24 = vector.broadcast %23 : vector<2x32x1xf32> to vector<2x32x32xf32>
    %25 = arith.mulf %20, %24 : vector<2x32x32xf32>
    %c1 = arith.constant 1 : index
    %26 = memref.load %arg4[%c1] : memref<4xf32, #tpu.memory_space<smem>>
    %27 = vector.broadcast %26 : f32 to vector<2x32x32xf32>
    %28 = arith.mulf %12, %27 : vector<2x32x32xf32>
    %cst_8 = arith.constant dense<0xFF800000> : vector<2x32xf32>
    %29 = vector.multi_reduction <maximumf>, %28, %cst_8 [2] : vector<2x32x32xf32> to vector<2x32xf32>
    %30 = vector.shape_cast %29 : vector<2x32xf32> to vector<2x32x1xf32>
    %31 = vector.broadcast %30 : vector<2x32x1xf32> to vector<2x32x32xf32>
    %32 = arith.subf %28, %31 : vector<2x32x32xf32>
    %33 = math.exp %32 : vector<2x32x32xf32>
    %cst_9 = arith.constant dense<0.000000e+00> : vector<2x32xf32>
    %34 = vector.multi_reduction <add>, %33, %cst_9 [2] : vector<2x32x32xf32> to vector<2x32xf32>
    %35 = vector.shape_cast %34 : vector<2x32xf32> to vector<2x32x1xf32>
    %36 = tpu.reciprocal %35 : vector<2x32x1xf32> -> vector<2x32x1xf32>
    %37 = vector.broadcast %36 : vector<2x32x1xf32> to vector<2x32x32xf32>
    %38 = arith.mulf %33, %37 : vector<2x32x32xf32>
    %c2 = arith.constant 2 : index
    %39 = memref.load %arg4[%c2] : memref<4xf32, #tpu.memory_space<smem>>
    %40 = vector.broadcast %39 : f32 to vector<2x32x32xf32>
    %41 = arith.mulf %12, %40 : vector<2x32x32xf32>
    %cst_10 = arith.constant dense<0xFF800000> : vector<2x32xf32>
    %42 = vector.multi_reduction <maximumf>, %41, %cst_10 [2] : vector<2x32x32xf32> to vector<2x32xf32>
    %43 = vector.shape_cast %42 : vector<2x32xf32> to vector<2x32x1xf32>
    %44 = vector.broadcast %43 : vector<2x32x1xf32> to vector<2x32x32xf32>
    %45 = arith.subf %41, %44 : vector<2x32x32xf32>
    %46 = math.exp %45 : vector<2x32x32xf32>
    %cst_11 = arith.constant dense<0.000000e+00> : vector<2x32xf32>
    %47 = vector.multi_reduction <add>, %46, %cst_11 [2] : vector<2x32x32xf32> to vector<2x32xf32>
    %48 = vector.shape_cast %47 : vector<2x32xf32> to vector<2x32x1xf32>
    %49 = tpu.reciprocal %48 : vector<2x32x1xf32> -> vector<2x32x1xf32>
    %50 = vector.broadcast %49 : vector<2x32x1xf32> to vector<2x32x32xf32>
    %51 = arith.mulf %46, %50 : vector<2x32x32xf32>
    %c3 = arith.constant 3 : index
    %52 = memref.load %arg4[%c3] : memref<4xf32, #tpu.memory_space<smem>>
    %53 = vector.broadcast %52 : f32 to vector<2x32x32xf32>
    %54 = arith.mulf %12, %53 : vector<2x32x32xf32>
    %cst_12 = arith.constant dense<0xFF800000> : vector<2x32xf32>
    %55 = vector.multi_reduction <maximumf>, %54, %cst_12 [2] : vector<2x32x32xf32> to vector<2x32xf32>
    %56 = vector.shape_cast %55 : vector<2x32xf32> to vector<2x32x1xf32>
    %57 = vector.broadcast %56 : vector<2x32x1xf32> to vector<2x32x32xf32>
    %58 = arith.subf %54, %57 : vector<2x32x32xf32>
    %59 = math.exp %58 : vector<2x32x32xf32>
    %cst_13 = arith.constant dense<0.000000e+00> : vector<2x32xf32>
    %60 = vector.multi_reduction <add>, %59, %cst_13 [2] : vector<2x32x32xf32> to vector<2x32xf32>
    %61 = vector.shape_cast %60 : vector<2x32xf32> to vector<2x32x1xf32>
    %62 = tpu.reciprocal %61 : vector<2x32x1xf32> -> vector<2x32x1xf32>
    %63 = vector.broadcast %62 : vector<2x32x1xf32> to vector<2x32x32xf32>
    %64 = arith.mulf %59, %63 : vector<2x32x32xf32>
    %65 = tpu.concatenate %25, %38, %51, %64 in 2 : vector<2x32x32xf32>, vector<2x32x32xf32>, vector<2x32x32xf32>, vector<2x32x32xf32> -> vector<2x32x128xf32>
    %c0_14 = arith.constant 0 : index
    %c0_15 = arith.constant 0 : index
    %c0_16 = arith.constant 0 : index
    %66 = vector.load %arg5[%c0_14, %c0_15, %c0_16] : memref<2x32x128xf32, #tpu.memory_space<vmem>>, vector<2x32x128xf32>
    tpu.vector_store %arg5[%c0_14, %c0_15, %c0_16], %65 {strides = array<i32>} : memref<2x32x128xf32, #tpu.memory_space<vmem>>, vector<2x32x128xf32>,
    return
  }
  func.func @transform_0(%arg0: i32) -> (i32, i32) {
    %c0_i32 = arith.constant 0 : i32
    %c0_i32_0 = arith.constant 0 : i32
    return %arg0, %c0_i32 : i32, i32
  }
  func.func @transform_1(%arg0: i32) -> (i32, i32) {
    %c0_i32 = arith.constant 0 : i32
    %c0_i32_0 = arith.constant 0 : i32
    %c0_i32_1 = arith.constant 0 : i32
    return %c0_i32, %c0_i32_0 : i32, i32
  }
  func.func @transform_2(%arg0: i32) -> (i32, i32) {
    %c0_i32 = arith.constant 0 : i32
    %c0_i32_0 = arith.constant 0 : i32
    %c0_i32_1 = arith.constant 0 : i32
    return %c0_i32, %c0_i32_0 : i32, i32
  }
  func.func @transform_3(%arg0: i32) -> i32 {
    %c0_i32 = arith.constant 0 : i32
    %c0_i32_0 = arith.constant 0 : i32
    return %c0_i32 : i32
  }
  func.func @transform_4(%arg0: i32) -> (i32, i32, i32) {
    %c0_i32 = arith.constant 0 : i32
    %c0_i32_0 = arith.constant 0 : i32
    %c0_i32_1 = arith.constant 0 : i32
    return %arg0, %c0_i32, %c0_i32_0 : i32, i32, i32
  }
}

</mosaic_0001>

<llo_original>
// kernel: tpu_custom_call.1
$region0: #{tpu_custom_call.1}
  #allocation0 [shape = 'u32[]', space=smem, size = 0x4, offset = 0x4, fixed_abs, tag = 'smem constant byte address 0x4 - core index']
  #allocation1 [shape = 'u32[72,128]{1,0:T(1,128)}', space=vmem, size = 0x9000, scoped, tag = 'internal scratch']
  %s0 = inlined_call_operand.vmem [shape: f32[2,1024], index: 0, kind: input, shape index: {}]
  %s1 = inlined_call_operand.vmem [shape: f32[1024,64], index: 1, kind: input, shape index: {}]
  %s2 = inlined_call_operand.vmem [shape: f32[1,64], index: 2, kind: input, shape index: {}]
  %s3 = inlined_call_operand.vmem [shape: f32[4], index: 3, kind: input, shape index: {}]
  %s4 = inlined_call_operand.hbm [shape: f32[2,32,128], index: 4, kind: output, shape index: {}]
  %s5 = sld [smem:[#allocation0]]
  $region30: #{tpu_custom_call.1} parent=0
    _
  %s7 = ssub.s32 1, %s5
  %s8 = scalar_select 0, %s7, %s5
  $region1: #{tpu_custom_call.1} parent=0
    #allocation2 [shape = 'u8[512]{0}', space=smem, size = 0x200, scoped, tag = 'input window, operand 3, single buffered']
    #allocation3 [shape = 's32[1]{0}', space=sflag, size = 0x4, scoped, tag = 'scoped memory for tpu_custom_call.1']
    #allocation4 [shape = 's32[1]{0}', space=sflag, size = 0x4, scoped, tag = 'scoped memory for tpu_custom_call.1']
    #allocation5 [shape = 'u8[32768]{0}', space=vmem, size = 0x8000, scoped, tag = 'output window, operand 0, single buffered']
    %9 = vsyncpa [#allocation4], 0
    %10 = vsyncpa [#allocation3], 0
    // Predicated region
    $region2: #{tpu_custom_call.1} parent=1 // pred_check
      _
    $region3: #{tpu_custom_call.1} parent=1 // pred_check_branch
      %12 = sbr.rel (0) target = $region5
    $region4: #{tpu_custom_call.1} parent=1 // pred_region
      _
    $region5: #{tpu_custom_call.1} parent=1 // pred_fallthru
      _
    // Predicated region
    $region6: #{tpu_custom_call.1} parent=1 // pred_check
      _
    $region7: #{tpu_custom_call.1} parent=1 // pred_check_branch
      %14 = sbr.rel (0) target = $region9
    $region8: #{tpu_custom_call.1} parent=1 // pred_region
      _
    $region9: #{tpu_custom_call.1} parent=1 // pred_fallthru
      _
    // Predicated region
    $region10: #{tpu_custom_call.1} parent=1 // pred_check
      _
    $region11: #{tpu_custom_call.1} parent=1 // pred_check_branch
      %16 = sbr.rel (0) target = $region13
    $region12: #{tpu_custom_call.1} parent=1 // pred_region
      _
    $region13: #{tpu_custom_call.1} parent=1 // pred_fallthru
      _
    // Predicated region
    $region14: #{tpu_custom_call.1} parent=1 // pred_check
      _
    $region15: #{tpu_custom_call.1} parent=1 // pred_check_branch
      %18 = sbr.rel (0) target = $region17
    $region16: #{tpu_custom_call.1} parent=1 // pred_region
      %20 = vsyncadd [#allocation4], 0
      %s22 = sshll.u32 %s3, 4
      %s23 = int_to_ptr.vmem [resolvable:$true] %s22
      %25 = dma.vmem_to_smem %s23, 16, [#allocation2], [#allocation4]
    $region17: #{tpu_custom_call.1} parent=1 // pred_fallthru
      _
    // Predicated region
    $region18: #{tpu_custom_call.1} parent=1 // pred_check
      _
    $region19: #{tpu_custom_call.1} parent=1 // pred_check_branch
      %27 = sbr.rel (0) target = $region21
    $region20: #{tpu_custom_call.1} parent=1 // pred_region
      %29 = dma.done [#allocation4], 16
    $region21: #{tpu_custom_call.1} parent=1 // pred_fallthru
      _
    %30 = sfence
    %v31 = vld [vmem:[%s0] sm:$0xff]
    %v32 = vld [vmem:[%s0 + $0x8] sm:$0xff]
    %v33 = vld [vmem:[%s1] sm:$0xff]
    %v34 = vld [vmem:[%s1 + $0x8] sm:$0xff]
    %v35 = vld [vmem:[%s1 + $0x10] sm:$0xff]
    %v36 = vld [vmem:[%s1 + $0x18] sm:$0xff]
    %v37 = vld [vmem:[%s1 + $0x20] sm:$0xff]
    %v38 = vld [vmem:[%s1 + $0x28] sm:$0xff]
    %v39 = vld [vmem:[%s1 + $0x30] sm:$0xff]
    %v40 = vld [vmem:[%s1 + $0x38] sm:$0xff]
    %v41 = vld [vmem:[%s1 + $0x40] sm:$0xff]
    %v42 = vld [vmem:[%s1 + $0x48] sm:$0xff]
    %v43 = vld [vmem:[%s1 + $0x50] sm:$0xff]
    %v44 = vld [vmem:[%s1 + $0x58] sm:$0xff]
    %v45 = vld [vmem:[%s1 + $0x60] sm:$0xff]
    %v46 = vld [vmem:[%s1 + $0x68] sm:$0xff]
    %v47 = vld [vmem:[%s1 + $0x70] sm:$0xff]
    %v48 = vld [vmem:[%s1 + $0x78] sm:$0xff]
    %v49 = vld [vmem:[%s1 + $0x80] sm:$0xff]
    %v50 = vld [vmem:[%s1 + $0x88] sm:$0xff]
    %v51 = vld [vmem:[%s1 + $0x90] sm:$0xff]
    %v52 = vld [vmem:[%s1 + $0x98] sm:$0xff]
    %v53 = vld [vmem:[%s1 + $0xa0] sm:$0xff]
    %v54 = vld [vmem:[%s1 + $0xa8] sm:$0xff]
    %v55 = vld [vmem:[%s1 + $0xb0] sm:$0xff]
    %v56 = vld [vmem:[%s1 + $0xb8] sm:$0xff]
    %v57 = vld [vmem:[%s1 + $0xc0] sm:$0xff]
    %v58 = vld [vmem:[%s1 + $0xc8] sm:$0xff]
    %v59 = vld [vmem:[%s1 + $0xd0] sm:$0xff]
    %v60 = vld [vmem:[%s1 + $0xd8] sm:$0xff]
    %v61 = vld [vmem:[%s1 + $0xe0] sm:$0xff]
    %v62 = vld [vmem:[%s1 + $0xe8] sm:$0xff]
    %v63 = vld [vmem:[%s1 + $0xf0] sm:$0xff]
    %v64 = vld [vmem:[%s1 + $0xf8] sm:$0xff]
    %v65 = vld [vmem:[%s1 + $0x100] sm:$0xff]
    %v66 = vld [vmem:[%s1 + $0x108] sm:$0xff]
    %v67 = vld [vmem:[%s1 + $0x110] sm:$0xff]
    %v68 = vld [vmem:[%s1 + $0x118] sm:$0xff]
    %v69 = vld [vmem:[%s1 + $0x120] sm:$0xff]
    %v70 = vld [vmem:[%s1 + $0x128] sm:$0xff]
    %v71 = vld [vmem:[%s1 + $0x130] sm:$0xff]
    %v72 = vld [vmem:[%s1 + $0x138] sm:$0xff]
    %v73 = vld [vmem:[%s1 + $0x140] sm:$0xff]
    %v74 = vld [vmem:[%s1 + $0x148] sm:$0xff]
    %v75 = vld [vmem:[%s1 + $0x150] sm:$0xff]
    %v76 = vld [vmem:[%s1 + $0x158] sm:$0xff]
    %v77 = vld [vmem:[%s1 + $0x160] sm:$0xff]
    %v78 = vld [vmem:[%s1 + $0x168] sm:$0xff]
    %v79 = vld [vmem:[%s1 + $0x170] sm:$0xff]
    %v80 = vld [vmem:[%s1 + $0x178] sm:$0xff]
    %v81 = vld [vmem:[%s1 + $0x180] sm:$0xff]
    %v82 = vld [vmem:[%s1 + $0x188] sm:$0xff]
    %v83 = vld [vmem:[%s1 + $0x190] sm:$0xff]
    %v84 = vld [vmem:[%s1 + $0x198] sm:$0xff]
    %v85 = vld [vmem:[%s1 + $0x1a0] sm:$0xff]
    %v86 = vld [vmem:[%s1 + $0x1a8] sm:$0xff]
    %v87 = vld [vmem:[%s1 + $0x1b0] sm:$0xff]
    %v88 = vld [vmem:[%s1 + $0x1b8] sm:$0xff]
    %v89 = vld [vmem:[%s1 + $0x1c0] sm:$0xff]
    %v90 = vld [vmem:[%s1 + $0x1c8] sm:$0xff]
    %v91 = vld [vmem:[%s1 + $0x1d0] sm:$0xff]
    %v92 = vld [vmem:[%s1 + $0x1d8] sm:$0xff]
    %v93 = vld [vmem:[%s1 + $0x1e0] sm:$0xff]
    %v94 = vld [vmem:[%s1 + $0x1e8] sm:$0xff]
    %v95 = vld [vmem:[%s1 + $0x1f0] sm:$0xff]
    %v96 = vld [vmem:[%s1 + $0x1f8] sm:$0xff]
    %v97 = vld [vmem:[%s1 + $0x200] sm:$0xff]
    %v98 = vld [vmem:[%s1 + $0x208] sm:$0xff]
    %v99 = vld [vmem:[%s1 + $0x210] sm:$0xff]
    %v100 = vld [vmem:[%s1 + $0x218] sm:$0xff]
    %v101 = vld [vmem:[%s1 + $0x220] sm:$0xff]
    %v102 = vld [vmem:[%s1 + $0x228] sm:$0xff]
    %v103 = vld [vmem:[%s1 + $0x230] sm:$0xff]
    %v104 = vld [vmem:[%s1 + $0x238] sm:$0xff]
    %v105 = vld [vmem:[%s1 + $0x240] sm:$0xff]
    %v106 = vld [vmem:[%s1 + $0x248] sm:$0xff]
    %v107 = vld [vmem:[%s1 + $0x250] sm:$0xff]
    %v108 = vld [vmem:[%s1 + $0x258] sm:$0xff]
    %v109 = vld [vmem:[%s1 + $0x260] sm:$0xff]
    %v110 = vld [vmem:[%s1 + $0x268] sm:$0xff]
    %v111 = vld [vmem:[%s1 + $0x270] sm:$0xff]
    %v112 = vld [vmem:[%s1 + $0x278] sm:$0xff]
    %v113 = vld [vmem:[%s1 + $0x280] sm:$0xff]
    %v114 = vld [vmem:[%s1 + $0x288] sm:$0xff]
    %v115 = vld [vmem:[%s1 + $0x290] sm:$0xff]
    %v116 = vld [vmem:[%s1 + $0x298] sm:$0xff]
    %v117 = vld [vmem:[%s1 + $0x2a0] sm:$0xff]
    %v118 = vld [vmem:[%s1 + $0x2a8] sm:$0xff]
    %v119 = vld [vmem:[%s1 + $0x2b0] sm:$0xff]
    %v120 = vld [vmem:[%s1 + $0x2b8] sm:$0xff]
    %v121 = vld [vmem:[%s1 + $0x2c0] sm:$0xff]
    %v122 = vld [vmem:[%s1 + $0x2c8] sm:$0xff]
    %v123 = vld [vmem:[%s1 + $0x2d0] sm:$0xff]
    %v124 = vld [vmem:[%s1 + $0x2d8] sm:$0xff]
    %v125 = vld [vmem:[%s1 + $0x2e0] sm:$0xff]
    %v126 = vld [vmem:[%s1 + $0x2e8] sm:$0xff]
    %v127 = vld [vmem:[%s1 + $0x2f0] sm:$0xff]
    %v128 = vld [vmem:[%s1 + $0x2f8] sm:$0xff]
    %v129 = vld [vmem:[%s1 + $0x300] sm:$0xff]
    %v130 = vld [vmem:[%s1 + $0x308] sm:$0xff]
    %v131 = vld [vmem:[%s1 + $0x310] sm:$0xff]
    %v132 = vld [vmem:[%s1 + $0x318] sm:$0xff]
    %v133 = vld [vmem:[%s1 + $0x320] sm:$0xff]
    %v134 = vld [vmem:[%s1 + $0x328] sm:$0xff]
    %v135 = vld [vmem:[%s1 + $0x330] sm:$0xff]
    %v136 = vld [vmem:[%s1 + $0x338] sm:$0xff]
    %v137 = vld [vmem:[%s1 + $0x340] sm:$0xff]
    %v138 = vld [vmem:[%s1 + $0x348] sm:$0xff]
    %v139 = vld [vmem:[%s1 + $0x350] sm:$0xff]
    %v140 = vld [vmem:[%s1 + $0x358] sm:$0xff]
    %v141 = vld [vmem:[%s1 + $0x360] sm:$0xff]
    %v142 = vld [vmem:[%s1 + $0x368] sm:$0xff]
    %v143 = vld [vmem:[%s1 + $0x370] sm:$0xff]
    %v144 = vld [vmem:[%s1 + $0x378] sm:$0xff]
    %v145 = vld [vmem:[%s1 + $0x380] sm:$0xff]
    %v146 = vld [vmem:[%s1 + $0x388] sm:$0xff]
    %v147 = vld [vmem:[%s1 + $0x390] sm:$0xff]
    %v148 = vld [vmem:[%s1 + $0x398] sm:$0xff]
    %v149 = vld [vmem:[%s1 + $0x3a0] sm:$0xff]
    %v150 = vld [vmem:[%s1 + $0x3a8] sm:$0xff]
    %v151 = vld [vmem:[%s1 + $0x3b0] sm:$0xff]
    %v152 = vld [vmem:[%s1 + $0x3b8] sm:$0xff]
    %v153 = vld [vmem:[%s1 + $0x3c0] sm:$0xff]
    %v154 = vld [vmem:[%s1 + $0x3c8] sm:$0xff]
    %v155 = vld [vmem:[%s1 + $0x3d0] sm:$0xff]
    %v156 = vld [vmem:[%s1 + $0x3d8] sm:$0xff]
    %v157 = vld [vmem:[%s1 + $0x3e0] sm:$0xff]
    %v158 = vld [vmem:[%s1 + $0x3e8] sm:$0xff]
    %v159 = vld [vmem:[%s1 + $0x3f0] sm:$0xff]
    %v160 = vld [vmem:[%s1 + $0x3f8] sm:$0xff]
    %v161 = vld [vmem:[%s2] sm:$0x1]
    %v163 = vperm.slane %v161, 0
    %167 = vst [vmem:[#allocation1] ss:$4 sm:$0xff] %v31
    %s168 = scalar_lea.vmem [#allocation1], 32
    %169 = vst [vmem:[%s168] ss:$4 sm:$0xff] %v32
    %v170 = vld.sshfl [vmem:[#allocation1] sm:$0xff pattern:$0x73625140]
    %v171 = vld.sshfl [vmem:[#allocation1 + $0x8] sm:$0xff pattern:$0x73625140]
    %v172 = vld.sshfl [vmem:[#allocation1 + $0x10] sm:$0xff pattern:$0x73625140]
    %v173 = vld.sshfl [vmem:[#allocation1 + $0x18] sm:$0xff pattern:$0x73625140]
    %v174 = vld.sshfl [vmem:[#allocation1 + $0x20] sm:$0xff pattern:$0x73625140]
    %v175 = vld.sshfl [vmem:[#allocation1 + $0x28] sm:$0xff pattern:$0x73625140]
    %v176 = vld.sshfl [vmem:[#allocation1 + $0x30] sm:$0xff pattern:$0x73625140]
    %v177 = vld.sshfl [vmem:[#allocation1 + $0x38] sm:$0xff pattern:$0x73625140]
    %186 = vmatpush.msra.mxu0 %v48
    %187 = vmatpush.msra.mxu0 %v47
    %188 = vmatpush.msra.mxu0 %v46
    %189 = vmatpush.msra.mxu0 %v45
    %190 = vmatpush.msra.mxu0 %v44
    %191 = vmatpush.msra.mxu0 %v43
    %192 = vmatpush.msra.mxu0 %v42
    %193 = vmatpush.msra.mxu0 %v41
    %194 = vmatpush.msra.mxu0 %v40
    %195 = vmatpush.msra.mxu0 %v39
    %196 = vmatpush.msra.mxu0 %v38
    %197 = vmatpush.msra.mxu0 %v37
    %198 = vmatpush.msra.mxu0 %v36
    %199 = vmatpush.msra.mxu0 %v35
    %200 = vmatpush.msra.mxu0 %v34
    %201 = vmatpush.msra.mxu0 %v33
    %202 = vmatmul.f32.gmra.mxu0 %v170
    %v203 = vpop.f32.mrf.mxu0
    %v204 = vadd.f32 %v163, %v203
    %205 = vdwg.mxu0
    %206 = vmatpush.msra.mxu0 %v64
    %207 = vmatpush.msra.mxu0 %v63
    %208 = vmatpush.msra.mxu0 %v62
    %209 = vmatpush.msra.mxu0 %v61
    %210 = vmatpush.msra.mxu0 %v60
    %211 = vmatpush.msra.mxu0 %v59
    %212 = vmatpush.msra.mxu0 %v58
    %213 = vmatpush.msra.mxu0 %v57
    %214 = vmatpush.msra.mxu0 %v56
    %215 = vmatpush.msra.mxu0 %v55
    %216 = vmatpush.msra.mxu0 %v54
    %217 = vmatpush.msra.mxu0 %v53
    %218 = vmatpush.msra.mxu0 %v52
    %219 = vmatpush.msra.mxu0 %v51
    %220 = vmatpush.msra.mxu0 %v50
    %221 = vmatpush.msra.mxu0 %v49
    %222 = vmatmul.f32.gmra.mxu0 %v171
    %v223 = vpop.f32.mrf.mxu0
    %v224 = vadd.f32 %v204, %v223
    %225 = vdwg.mxu0
    %226 = vmatpush.msra.mxu0 %v80
    %227 = vmatpush.msra.mxu0 %v79
    %228 = vmatpush.msra.mxu0 %v78
    %229 = vmatpush.msra.mxu0 %v77
    %230 = vmatpush.msra.mxu0 %v76
    %231 = vmatpush.msra.mxu0 %v75
    %232 = vmatpush.msra.mxu0 %v74
    %233 = vmatpush.msra.mxu0 %v73
    %234 = vmatpush.msra.mxu0 %v72
    %235 = vmatpush.msra.mxu0 %v71
    %236 = vmatpush.msra.mxu0 %v70
    %237 = vmatpush.msra.mxu0 %v69
    %238 = vmatpush.msra.mxu0 %v68
    %239 = vmatpush.msra.mxu0 %v67
    %240 = vmatpush.msra.mxu0 %v66
    %241 = vmatpush.msra.mxu0 %v65
    %242 = vmatmul.f32.gmra.mxu0 %v172
    %v243 = vpop.f32.mrf.mxu0
    %v244 = vadd.f32 %v224, %v243
    %245 = vdwg.mxu0
    %246 = vmatpush.msra.mxu0 %v96
    %247 = vmatpush.msra.mxu0 %v95
    %248 = vmatpush.msra.mxu0 %v94
    %249 = vmatpush.msra.mxu0 %v93
    %250 = vmatpush.msra.mxu0 %v92
    %251 = vmatpush.msra.mxu0 %v91
    %252 = vmatpush.msra.mxu0 %v90
    %253 = vmatpush.msra.mxu0 %v89
    %254 = vmatpush.msra.mxu0 %v88
    %255 = vmatpush.msra.mxu0 %v87
    %256 = vmatpush.msra.mxu0 %v86
    %257 = vmatpush.msra.mxu0 %v85
    %258 = vmatpush.msra.mxu0 %v84
    %259 = vmatpush.msra.mxu0 %v83
    %260 = vmatpush.msra.mxu0 %v82
    %261 = vmatpush.msra.mxu0 %v81
    %262 = vmatmul.f32.gmra.mxu0 %v173
    %v263 = vpop.f32.mrf.mxu0
    %v264 = vadd.f32 %v244, %v263
    %265 = vdwg.mxu0
    %266 = vmatpush.msra.mxu0 %v112
    %267 = vmatpush.msra.mxu0 %v111
    %268 = vmatpush.msra.mxu0 %v110
    %269 = vmatpush.msra.mxu0 %v109
    %270 = vmatpush.msra.mxu0 %v108
    %271 = vmatpush.msra.mxu0 %v107
    %272 = vmatpush.msra.mxu0 %v106
    %273 = vmatpush.msra.mxu0 %v105
    %274 = vmatpush.msra.mxu0 %v104
    %275 = vmatpush.msra.mxu0 %v103
    %276 = vmatpush.msra.mxu0 %v102
    %277 = vmatpush.msra.mxu0 %v101
    %278 = vmatpush.msra.mxu0 %v100
    %279 = vmatpush.msra.mxu0 %v99
    %280 = vmatpush.msra.mxu0 %v98
    %281 = vmatpush.msra.mxu0 %v97
    %282 = vmatmul.f32.gmra.mxu0 %v174
    %v283 = vpop.f32.mrf.mxu0
    %v284 = vadd.f32 %v264, %v283
    %285 = vdwg.mxu0
    %286 = vmatpush.msra.mxu0 %v128
    %287 = vmatpush.msra.mxu0 %v127
    %288 = vmatpush.msra.mxu0 %v126
    %289 = vmatpush.msra.mxu0 %v125
    %290 = vmatpush.msra.mxu0 %v124
    %291 = vmatpush.msra.mxu0 %v123
    %292 = vmatpush.msra.mxu0 %v122
    %293 = vmatpush.msra.mxu0 %v121
    %294 = vmatpush.msra.mxu0 %v120
    %295 = vmatpush.msra.mxu0 %v119
    %296 = vmatpush.msra.mxu0 %v118
    %297 = vmatpush.msra.mxu0 %v117
    %298 = vmatpush.msra.mxu0 %v116
    %299 = vmatpush.msra.mxu0 %v115
    %300 = vmatpush.msra.mxu0 %v114
    %301 = vmatpush.msra.mxu0 %v113
    %302 = vmatmul.f32.gmra.mxu0 %v175
    %v303 = vpop.f32.mrf.mxu0
    %v304 = vadd.f32 %v284, %v303
    %305 = vdwg.mxu0
    %306 = vmatpush.msra.mxu0 %v144
    %307 = vmatpush.msra.mxu0 %v143
    %308 = vmatpush.msra.mxu0 %v142
    %309 = vmatpush.msra.mxu0 %v141
    %310 = vmatpush.msra.mxu0 %v140
    %311 = vmatpush.msra.mxu0 %v139
    %312 = vmatpush.msra.mxu0 %v138
    %313 = vmatpush.msra.mxu0 %v137
    %314 = vmatpush.msra.mxu0 %v136
    %315 = vmatpush.msra.mxu0 %v135
    %316 = vmatpush.msra.mxu0 %v134
    %317 = vmatpush.msra.mxu0 %v133
    %318 = vmatpush.msra.mxu0 %v132
    %319 = vmatpush.msra.mxu0 %v131
    %320 = vmatpush.msra.mxu0 %v130
    %321 = vmatpush.msra.mxu0 %v129
    %322 = vmatmul.f32.gmra.mxu0 %v176
    %v323 = vpop.f32.mrf.mxu0
    %v324 = vadd.f32 %v304, %v323
    %325 = vdwg.mxu0
    %326 = vmatpush.msra.mxu0 %v160
    %327 = vmatpush.msra.mxu0 %v159
    %328 = vmatpush.msra.mxu0 %v158
    %329 = vmatpush.msra.mxu0 %v157
    %330 = vmatpush.msra.mxu0 %v156
    %331 = vmatpush.msra.mxu0 %v155
    %332 = vmatpush.msra.mxu0 %v154
    %333 = vmatpush.msra.mxu0 %v153
    %334 = vmatpush.msra.mxu0 %v152
    %335 = vmatpush.msra.mxu0 %v151
    %336 = vmatpush.msra.mxu0 %v150
    %337 = vmatpush.msra.mxu0 %v149
    %338 = vmatpush.msra.mxu0 %v148
    %339 = vmatpush.msra.mxu0 %v147
    %340 = vmatpush.msra.mxu0 %v146
    %341 = vmatpush.msra.mxu0 %v145
    %342 = vmatmul.f32.gmra.mxu0 %v177
    %v343 = vpop.f32.mrf.mxu0
    %v344 = vadd.f32 %v324, %v343
    %345 = vdwg.mxu0
    %v346 = vperm.slane %v344, 0
    %v347 = vlaneseq
    %v348 = vshrl.u32 %v347, 7
    %350 = vset.pattern.permute.xlu0 %v348
    %351 = vperm.xlu0 %350, %v346
    %v352 = vpop.permute.xlu0 %351
    %v353 = vlaneseq
    %v354 = vshrl.u32 %v353, 7
    %v355 = vadd.s32 %v354, 8
    %356 = vset.pattern.permute.xlu0 %v355
    %357 = vperm.xlu0 %356, %v346
    %v358 = vpop.permute.xlu0 %357
    %v359 = vlaneseq
    %v360 = vshrl.u32 %v359, 7
    %v361 = vadd.s32 %v360, 16
    %362 = vset.pattern.permute.xlu0 %v361
    %363 = vperm.xlu0 %362, %v346
    %v364 = vpop.permute.xlu0 %363
    %v365 = vlaneseq
    %v366 = vshrl.u32 %v365, 7
    %v367 = vadd.s32 %v366, 24
    %368 = vset.pattern.permute.xlu0 %v367
    %369 = vperm.xlu0 %368, %v346
    %v370 = vpop.permute.xlu0 %369
    %v371 = vperm.slane %v344, 1
    %v372 = vlaneseq
    %v373 = vshrl.u32 %v372, 7
    %375 = vset.pattern.permute.xlu0 %v373
    %376 = vperm.xlu0 %375, %v371
    %v377 = vpop.permute.xlu0 %376
    %v378 = vlaneseq
    %v379 = vshrl.u32 %v378, 7
    %v380 = vadd.s32 %v379, 8
    %381 = vset.pattern.permute.xlu0 %v380
    %382 = vperm.xlu0 %381, %v371
    %v383 = vpop.permute.xlu0 %382
    %v384 = vlaneseq
    %v385 = vshrl.u32 %v384, 7
    %v386 = vadd.s32 %v385, 16
    %387 = vset.pattern.permute.xlu0 %v386
    %388 = vperm.xlu0 %387, %v371
    %v389 = vpop.permute.xlu0 %388
    %v390 = vlaneseq
    %v391 = vshrl.u32 %v390, 7
    %v392 = vadd.s32 %v391, 24
    %393 = vset.pattern.permute.xlu0 %v392
    %394 = vperm.xlu0 %393, %v371
    %v395 = vpop.permute.xlu0 %394
    %v397 = vrot.slane %v344, 1
    %v398 = vperm.slane %v344, 0
    %v399 = vperm.slane %v397, 0
    %v402 = vmul.f32 %v352, %v398
    %v403 = vmul.f32 %v358, %v398
    %v404 = vmul.f32 %v364, %v398
    %v405 = vmul.f32 %v370, %v398
    %v406 = vmul.f32 %v377, %v399
    %v407 = vmul.f32 %v383, %v399
    %v408 = vmul.f32 %v389, %v399
    %v409 = vmul.f32 %v395, %v399
    %s410 = sld [smem:[#allocation2]]
    %v411 = vstv %s410
    %v412 = vmul.f32 %v402, %v411
    %v413 = vmul.f32 %v403, %v411
    %v414 = vmul.f32 %v404, %v411
    %v415 = vmul.f32 %v405, %v411
    %v416 = vmul.f32 %v406, %v411
    %v417 = vmul.f32 %v407, %v411
    %v418 = vmul.f32 %v408, %v411
    %v419 = vmul.f32 %v409, %v411
    %vm420 = vcmask 523520
    %v421 = vsel %vm420, %v412, -inf
    %422 = vmax.xlane.f32.xlu0 %v421
    %v423 = vpop.xlane.xlu0 %422
    %v424 = vsel %vm420, %v413, -inf
    %425 = vmax.xlane.f32.xlu0 %v424
    %v426 = vpop.xlane.xlu0 %425
    %v427 = vsel %vm420, %v414, -inf
    %428 = vmax.xlane.f32.xlu0 %v427
    %v429 = vpop.xlane.xlu0 %428
    %v430 = vsel %vm420, %v415, -inf
    %431 = vmax.xlane.f32.xlu0 %v430
    %v432 = vpop.xlane.xlu0 %431
    %v433 = vsel %vm420, %v416, -inf
    %434 = vmax.xlane.f32.xlu0 %v433
    %v435 = vpop.xlane.xlu0 %434
    %v436 = vsel %vm420, %v417, -inf
    %437 = vmax.xlane.f32.xlu0 %v436
    %v438 = vpop.xlane.xlu0 %437
    %v439 = vsel %vm420, %v418, -inf
    %440 = vmax.xlane.f32.xlu0 %v439
    %v441 = vpop.xlane.xlu0 %440
    %v442 = vsel %vm420, %v419, -inf
    %443 = vmax.xlane.f32.xlu0 %v442
    %v444 = vpop.xlane.xlu0 %443
    %v445 = vsub.f32 %v412, %v423
    %v446 = vsub.f32 %v413, %v426
    %v447 = vsub.f32 %v414, %v429
    %v448 = vsub.f32 %v415, %v432
    %v449 = vsub.f32 %v416, %v435
    %v450 = vsub.f32 %v417, %v438
    %v451 = vsub.f32 %v418, %v441
    %v452 = vsub.f32 %v419, %v444
    %v453 = vmul.f32 %v445, 1.442695
    %v454 = vpow.pop %v453
    %v455 = vmul.f32 %v446, 1.442695
    %v456 = vpow.pop %v455
    %v457 = vmul.f32 %v447, 1.442695
    %v458 = vpow.pop %v457
    %v459 = vmul.f32 %v448, 1.442695
    %v460 = vpow.pop %v459
    %v461 = vmul.f32 %v449, 1.442695
    %v462 = vpow.pop %v461
    %v463 = vmul.f32 %v450, 1.442695
    %v464 = vpow.pop %v463
    %v465 = vmul.f32 %v451, 1.442695
    %v466 = vpow.pop %v465
    %v467 = vmul.f32 %v452, 1.442695
    %v468 = vpow.pop %v467
    %477 = vrot.lane.b32.xlu0 %v454, 96
    %v478 = vpop.permute.xlu0 %477
    %479 = vrot.lane.b32.xlu0 %v456, 96
    %v480 = vpop.permute.xlu0 %479
    %481 = vrot.lane.b32.xlu0 %v458, 96
    %v482 = vpop.permute.xlu0 %481
    %483 = vrot.lane.b32.xlu0 %v460, 96
    %v484 = vpop.permute.xlu0 %483
    %485 = vrot.lane.b32.xlu0 %v462, 96
    %v486 = vpop.permute.xlu0 %485
    %487 = vrot.lane.b32.xlu0 %v464, 96
    %v488 = vpop.permute.xlu0 %487
    %489 = vrot.lane.b32.xlu0 %v466, 96
    %v490 = vpop.permute.xlu0 %489
    %491 = vrot.lane.b32.xlu0 %v468, 96
    %v492 = vpop.permute.xlu0 %491
    %vm501 = vcmask 261120
    %v502 = vsel %vm501, %v478, 0.0
    %503 = vadd.xlane.f32.xlu0 %v502
    %v504 = vpop.xlane.xlu0 %503
    %v505 = vsel %vm501, %v480, 0.0
    %506 = vadd.xlane.f32.xlu0 %v505
    %v507 = vpop.xlane.xlu0 %506
    %v508 = vsel %vm501, %v482, 0.0
    %509 = vadd.xlane.f32.xlu0 %v508
    %v510 = vpop.xlane.xlu0 %509
    %v511 = vsel %vm501, %v484, 0.0
    %512 = vadd.xlane.f32.xlu0 %v511
    %v513 = vpop.xlane.xlu0 %512
    %v514 = vsel %vm501, %v486, 0.0
    %515 = vadd.xlane.f32.xlu0 %v514
    %v516 = vpop.xlane.xlu0 %515
    %v517 = vsel %vm501, %v488, 0.0
    %518 = vadd.xlane.f32.xlu0 %v517
    %v519 = vpop.xlane.xlu0 %518
    %v520 = vsel %vm501, %v490, 0.0
    %521 = vadd.xlane.f32.xlu0 %v520
    %v522 = vpop.xlane.xlu0 %521
    %v523 = vsel %vm501, %v492, 0.0
    %524 = vadd.xlane.f32.xlu0 %v523
    %v525 = vpop.xlane.xlu0 %524
    %v526 = vrcp.pop %v504
    %v527 = vmul.f32 %v504, %v526
    %v528 = vsub.f32 1.0, %v527
    %v529 = vmul.f32 %v526, %v528
    %v530 = vadd.f32 %v526, %v529
    %vm531 = vweird.f32 %v504
    %vm532 = vweird.f32 %v526
    %vm533 = vmor %vm531, %vm532
    %v534 = vsel %vm533, %v526, %v530
    %v535 = vand.u32 2147483647, %v504
    %vm536 = vcmp.eq.f32.partialorder %v535, 8.507059e+37
    %v537 = vand.u32 %v504, 2147483648
    %v538 = vor.u32 1.1754944e-38, %v537
    %v539 = vsel %vm536, %v538, %v534
    %v540 = vrcp.pop %v507
    %v541 = vmul.f32 %v507, %v540
    %v542 = vsub.f32 1.0, %v541
    %v543 = vmul.f32 %v540, %v542
    %v544 = vadd.f32 %v540, %v543
    %vm545 = vweird.f32 %v507
    %vm546 = vweird.f32 %v540
    %vm547 = vmor %vm545, %vm546
    %v548 = vsel %vm547, %v540, %v544
    %v549 = vand.u32 2147483647, %v507
    %vm550 = vcmp.eq.f32.partialorder %v549, 8.507059e+37
    %v551 = vand.u32 %v507, 2147483648
    %v552 = vor.u32 1.1754944e-38, %v551
    %v553 = vsel %vm550, %v552, %v548
    %v554 = vrcp.pop %v510
    %v555 = vmul.f32 %v510, %v554
    %v556 = vsub.f32 1.0, %v555
    %v557 = vmul.f32 %v554, %v556
    %v558 = vadd.f32 %v554, %v557
    %vm559 = vweird.f32 %v510
    %vm560 = vweird.f32 %v554
    %vm561 = vmor %vm559, %vm560
    %v562 = vsel %vm561, %v554, %v558
    %v563 = vand.u32 2147483647, %v510
    %vm564 = vcmp.eq.f32.partialorder %v563, 8.507059e+37
    %v565 = vand.u32 %v510, 2147483648
    %v566 = vor.u32 1.1754944e-38, %v565
    %v567 = vsel %vm564, %v566, %v562
    %v568 = vrcp.pop %v513
    %v569 = vmul.f32 %v513, %v568
    %v570 = vsub.f32 1.0, %v569
    %v571 = vmul.f32 %v568, %v570
    %v572 = vadd.f32 %v568, %v571
    %vm573 = vweird.f32 %v513
    %vm574 = vweird.f32 %v568
    %vm575 = vmor %vm573, %vm574
    %v576 = vsel %vm575, %v568, %v572
    %v577 = vand.u32 2147483647, %v513
    %vm578 = vcmp.eq.f32.partialorder %v577, 8.507059e+37
    %v579 = vand.u32 %v513, 2147483648
    %v580 = vor.u32 1.1754944e-38, %v579
    %v581 = vsel %vm578, %v580, %v576
    %v582 = vrcp.pop %v516
    %v583 = vmul.f32 %v516, %v582
    %v584 = vsub.f32 1.0, %v583
    %v585 = vmul.f32 %v582, %v584
    %v586 = vadd.f32 %v582, %v585
    %vm587 = vweird.f32 %v516
    %vm588 = vweird.f32 %v582
    %vm589 = vmor %vm587, %vm588
    %v590 = vsel %vm589, %v582, %v586
    %v591 = vand.u32 2147483647, %v516
    %vm592 = vcmp.eq.f32.partialorder %v591, 8.507059e+37
    %v593 = vand.u32 %v516, 2147483648
    %v594 = vor.u32 1.1754944e-38, %v593
    %v595 = vsel %vm592, %v594, %v590
    %v596 = vrcp.pop %v519
    %v597 = vmul.f32 %v519, %v596
    %v598 = vsub.f32 1.0, %v597
    %v599 = vmul.f32 %v596, %v598
    %v600 = vadd.f32 %v596, %v599
    %vm601 = vweird.f32 %v519
    %vm602 = vweird.f32 %v596
    %vm603 = vmor %vm601, %vm602
    %v604 = vsel %vm603, %v596, %v600
    %v605 = vand.u32 2147483647, %v519
    %vm606 = vcmp.eq.f32.partialorder %v605, 8.507059e+37
    %v607 = vand.u32 %v519, 2147483648
    %v608 = vor.u32 1.1754944e-38, %v607
    %v609 = vsel %vm606, %v608, %v604
    %v610 = vrcp.pop %v522
    %v611 = vmul.f32 %v522, %v610
    %v612 = vsub.f32 1.0, %v611
    %v613 = vmul.f32 %v610, %v612
    %v614 = vadd.f32 %v610, %v613
    %vm615 = vweird.f32 %v522
    %vm616 = vweird.f32 %v610
    %vm617 = vmor %vm615, %vm616
    %v618 = vsel %vm617, %v610, %v614
    %v619 = vand.u32 2147483647, %v522
    %vm620 = vcmp.eq.f32.partialorder %v619, 8.507059e+37
    %v621 = vand.u32 %v522, 2147483648
    %v622 = vor.u32 1.1754944e-38, %v621
    %v623 = vsel %vm620, %v622, %v618
    %v624 = vrcp.pop %v525
    %v625 = vmul.f32 %v525, %v624
    %v626 = vsub.f32 1.0, %v625
    %v627 = vmul.f32 %v624, %v626
    %v628 = vadd.f32 %v624, %v627
    %vm629 = vweird.f32 %v525
    %vm630 = vweird.f32 %v624
    %vm631 = vmor %vm629, %vm630
    %v632 = vsel %vm631, %v624, %v628
    %v633 = vand.u32 2147483647, %v525
    %vm634 = vcmp.eq.f32.partialorder %v633, 8.507059e+37
    %v635 = vand.u32 %v525, 2147483648
    %v636 = vor.u32 1.1754944e-38, %v635
    %v637 = vsel %vm634, %v636, %v632
    %v638 = vmul.f32 %v454, %v539
    %v639 = vmul.f32 %v456, %v553
    %v640 = vmul.f32 %v458, %v567
    %v641 = vmul.f32 %v460, %v581
    %v642 = vmul.f32 %v462, %v595
    %v643 = vmul.f32 %v464, %v609
    %v644 = vmul.f32 %v466, %v623
    %v645 = vmul.f32 %v468, %v637
    %s646 = sld [smem:[#allocation2 + $0x1]]
    %v647 = vstv %s646
    %v648 = vmul.f32 %v402, %v647
    %v649 = vmul.f32 %v403, %v647
    %v650 = vmul.f32 %v404, %v647
    %v651 = vmul.f32 %v405, %v647
    %v652 = vmul.f32 %v406, %v647
    %v653 = vmul.f32 %v407, %v647
    %v654 = vmul.f32 %v408, %v647
    %v655 = vmul.f32 %v409, %v647
    %v656 = vsel %vm420, %v648, -inf
    %657 = vmax.xlane.f32.xlu0 %v656
    %v658 = vpop.xlane.xlu0 %657
    %v659 = vsel %vm420, %v649, -inf
    %660 = vmax.xlane.f32.xlu0 %v659
    %v661 = vpop.xlane.xlu0 %660
    %v662 = vsel %vm420, %v650, -inf
    %663 = vmax.xlane.f32.xlu0 %v662
    %v664 = vpop.xlane.xlu0 %663
    %v665 = vsel %vm420, %v651, -inf
    %666 = vmax.xlane.f32.xlu0 %v665
    %v667 = vpop.xlane.xlu0 %666
    %v668 = vsel %vm420, %v652, -inf
    %669 = vmax.xlane.f32.xlu0 %v668
    %v670 = vpop.xlane.xlu0 %669
    %v671 = vsel %vm420, %v653, -inf
    %672 = vmax.xlane.f32.xlu0 %v671
    %v673 = vpop.xlane.xlu0 %672
    %v674 = vsel %vm420, %v654, -inf
    %675 = vmax.xlane.f32.xlu0 %v674
    %v676 = vpop.xlane.xlu0 %675
    %v677 = vsel %vm420, %v655, -inf
    %678 = vmax.xlane.f32.xlu0 %v677
    %v679 = vpop.xlane.xlu0 %678
    %v680 = vsub.f32 %v648, %v658
    %v681 = vsub.f32 %v649, %v661
    %v682 = vsub.f32 %v650, %v664
    %v683 = vsub.f32 %v651, %v667
    %v684 = vsub.f32 %v652, %v670
    %v685 = vsub.f32 %v653, %v673
    %v686 = vsub.f32 %v654, %v676
    %v687 = vsub.f32 %v655, %v679
    %v688 = vmul.f32 %v680, 1.442695
    %v689 = vpow.pop %v688
    %v690 = vmul.f32 %v681, 1.442695
    %v691 = vpow.pop %v690
    %v692 = vmul.f32 %v682, 1.442695
    %v693 = vpow.pop %v692
    %v694 = vmul.f32 %v683, 1.442695
    %v695 = vpow.pop %v694
    %v696 = vmul.f32 %v684, 1.442695
    %v697 = vpow.pop %v696
    %v698 = vmul.f32 %v685, 1.442695
    %v699 = vpow.pop %v698
    %v700 = vmul.f32 %v686, 1.442695
    %v701 = vpow.pop %v700
    %v702 = vmul.f32 %v687, 1.442695
    %v703 = vpow.pop %v702
    %712 = vrot.lane.b32.xlu0 %v689, 96
    %v713 = vpop.permute.xlu0 %712
    %714 = vrot.lane.b32.xlu0 %v691, 96
    %v715 = vpop.permute.xlu0 %714
    %716 = vrot.lane.b32.xlu0 %v693, 96
    %v717 = vpop.permute.xlu0 %716
    %718 = vrot.lane.b32.xlu0 %v695, 96
    %v719 = vpop.permute.xlu0 %718
    %720 = vrot.lane.b32.xlu0 %v697, 96
    %v721 = vpop.permute.xlu0 %720
    %722 = vrot.lane.b32.xlu0 %v699, 96
    %v723 = vpop.permute.xlu0 %722
    %724 = vrot.lane.b32.xlu0 %v701, 96
    %v725 = vpop.permute.xlu0 %724
    %726 = vrot.lane.b32.xlu0 %v703, 96
    %v727 = vpop.permute.xlu0 %726
    %v736 = vsel %vm501, %v713, 0.0
    %737 = vadd.xlane.f32.xlu0 %v736
    %v738 = vpop.xlane.xlu0 %737
    %v739 = vsel %vm501, %v715, 0.0
    %740 = vadd.xlane.f32.xlu0 %v739
    %v741 = vpop.xlane.xlu0 %740
    %v742 = vsel %vm501, %v717, 0.0
    %743 = vadd.xlane.f32.xlu0 %v742
    %v744 = vpop.xlane.xlu0 %743
    %v745 = vsel %vm501, %v719, 0.0
    %746 = vadd.xlane.f32.xlu0 %v745
    %v747 = vpop.xlane.xlu0 %746
    %v748 = vsel %vm501, %v721, 0.0
    %749 = vadd.xlane.f32.xlu0 %v748
    %v750 = vpop.xlane.xlu0 %749
    %v751 = vsel %vm501, %v723, 0.0
    %752 = vadd.xlane.f32.xlu0 %v751
    %v753 = vpop.xlane.xlu0 %752
    %v754 = vsel %vm501, %v725, 0.0
    %755 = vadd.xlane.f32.xlu0 %v754
    %v756 = vpop.xlane.xlu0 %755
    %v757 = vsel %vm501, %v727, 0.0
    %758 = vadd.xlane.f32.xlu0 %v757
    %v759 = vpop.xlane.xlu0 %758
    %v760 = vrcp.pop %v738
    %v761 = vmul.f32 %v738, %v760
    %v762 = vsub.f32 1.0, %v761
    %v763 = vmul.f32 %v760, %v762
    %v764 = vadd.f32 %v760, %v763
    %vm765 = vweird.f32 %v738
    %vm766 = vweird.f32 %v760
    %vm767 = vmor %vm765, %vm766
    %v768 = vsel %vm767, %v760, %v764
    %v769 = vand.u32 2147483647, %v738
    %vm770 = vcmp.eq.f32.partialorder %v769, 8.507059e+37
    %v771 = vand.u32 %v738, 2147483648
    %v772 = vor.u32 1.1754944e-38, %v771
    %v773 = vsel %vm770, %v772, %v768
    %v774 = vrcp.pop %v741
    %v775 = vmul.f32 %v741, %v774
    %v776 = vsub.f32 1.0, %v775
    %v777 = vmul.f32 %v774, %v776
    %v778 = vadd.f32 %v774, %v777
    %vm779 = vweird.f32 %v741
    %vm780 = vweird.f32 %v774
    %vm781 = vmor %vm779, %vm780
    %v782 = vsel %vm781, %v774, %v778
    %v783 = vand.u32 2147483647, %v741
    %vm784 = vcmp.eq.f32.partialorder %v783, 8.507059e+37
    %v785 = vand.u32 %v741, 2147483648
    %v786 = vor.u32 1.1754944e-38, %v785
    %v787 = vsel %vm784, %v786, %v782
    %v788 = vrcp.pop %v744
    %v789 = vmul.f32 %v744, %v788
    %v790 = vsub.f32 1.0, %v789
    %v791 = vmul.f32 %v788, %v790
    %v792 = vadd.f32 %v788, %v791
    %vm793 = vweird.f32 %v744
    %vm794 = vweird.f32 %v788
    %vm795 = vmor %vm793, %vm794
    %v796 = vsel %vm795, %v788, %v792
    %v797 = vand.u32 2147483647, %v744
    %vm798 = vcmp.eq.f32.partialorder %v797, 8.507059e+37
    %v799 = vand.u32 %v744, 2147483648
    %v800 = vor.u32 1.1754944e-38, %v799
    %v801 = vsel %vm798, %v800, %v796
    %v802 = vrcp.pop %v747
    %v803 = vmul.f32 %v747, %v802
    %v804 = vsub.f32 1.0, %v803
    %v805 = vmul.f32 %v802, %v804
    %v806 = vadd.f32 %v802, %v805
    %vm807 = vweird.f32 %v747
    %vm808 = vweird.f32 %v802
    %vm809 = vmor %vm807, %vm808
    %v810 = vsel %vm809, %v802, %v806
    %v811 = vand.u32 2147483647, %v747
    %vm812 = vcmp.eq.f32.partialorder %v811, 8.507059e+37
    %v813 = vand.u32 %v747, 2147483648
    %v814 = vor.u32 1.1754944e-38, %v813
    %v815 = vsel %vm812, %v814, %v810
    %v816 = vrcp.pop %v750
    %v817 = vmul.f32 %v750, %v816
    %v818 = vsub.f32 1.0, %v817
    %v819 = vmul.f32 %v816, %v818
    %v820 = vadd.f32 %v816, %v819
    %vm821 = vweird.f32 %v750
    %vm822 = vweird.f32 %v816
    %vm823 = vmor %vm821, %vm822
    %v824 = vsel %vm823, %v816, %v820
    %v825 = vand.u32 2147483647, %v750
    %vm826 = vcmp.eq.f32.partialorder %v825, 8.507059e+37
    %v827 = vand.u32 %v750, 2147483648
    %v828 = vor.u32 1.1754944e-38, %v827
    %v829 = vsel %vm826, %v828, %v824
    %v830 = vrcp.pop %v753
    %v831 = vmul.f32 %v753, %v830
    %v832 = vsub.f32 1.0, %v831
    %v833 = vmul.f32 %v830, %v832
    %v834 = vadd.f32 %v830, %v833
    %vm835 = vweird.f32 %v753
    %vm836 = vweird.f32 %v830
    %vm837 = vmor %vm835, %vm836
    %v838 = vsel %vm837, %v830, %v834
    %v839 = vand.u32 2147483647, %v753
    %vm840 = vcmp.eq.f32.partialorder %v839, 8.507059e+37
    %v841 = vand.u32 %v753, 2147483648
    %v842 = vor.u32 1.1754944e-38, %v841
    %v843 = vsel %vm840, %v842, %v838
    %v844 = vrcp.pop %v756
    %v845 = vmul.f32 %v756, %v844
    %v846 = vsub.f32 1.0, %v845
    %v847 = vmul.f32 %v844, %v846
    %v848 = vadd.f32 %v844, %v847
    %vm849 = vweird.f32 %v756
    %vm850 = vweird.f32 %v844
    %vm851 = vmor %vm849, %vm850
    %v852 = vsel %vm851, %v844, %v848
    %v853 = vand.u32 2147483647, %v756
    %vm854 = vcmp.eq.f32.partialorder %v853, 8.507059e+37
    %v855 = vand.u32 %v756, 2147483648
    %v856 = vor.u32 1.1754944e-38, %v855
    %v857 = vsel %vm854, %v856, %v852
    %v858 = vrcp.pop %v759
    %v859 = vmul.f32 %v759, %v858
    %v860 = vsub.f32 1.0, %v859
    %v861 = vmul.f32 %v858, %v860
    %v862 = vadd.f32 %v858, %v861
    %vm863 = vweird.f32 %v759
    %vm864 = vweird.f32 %v858
    %vm865 = vmor %vm863, %vm864
    %v866 = vsel %vm865, %v858, %v862
    %v867 = vand.u32 2147483647, %v759
    %vm868 = vcmp.eq.f32.partialorder %v867, 8.507059e+37
    %v869 = vand.u32 %v759, 2147483648
    %v870 = vor.u32 1.1754944e-38, %v869
    %v871 = vsel %vm868, %v870, %v866
    %v872 = vmul.f32 %v689, %v773
    %v873 = vmul.f32 %v691, %v787
    %v874 = vmul.f32 %v693, %v801
    %v875 = vmul.f32 %v695, %v815
    %v876 = vmul.f32 %v697, %v829
    %v877 = vmul.f32 %v699, %v843
    %v878 = vmul.f32 %v701, %v857
    %v879 = vmul.f32 %v703, %v871
    %s880 = sld [smem:[#allocation2 + $0x2]]
    %v881 = vstv %s880
    %v882 = vmul.f32 %v402, %v881
    %v883 = vmul.f32 %v403, %v881
    %v884 = vmul.f32 %v404, %v881
    %v885 = vmul.f32 %v405, %v881
    %v886 = vmul.f32 %v406, %v881
    %v887 = vmul.f32 %v407, %v881
    %v888 = vmul.f32 %v408, %v881
    %v889 = vmul.f32 %v409, %v881
    %v890 = vsel %vm420, %v882, -inf
    %891 = vmax.xlane.f32.xlu0 %v890
    %v892 = vpop.xlane.xlu0 %891
    %v893 = vsel %vm420, %v883, -inf
    %894 = vmax.xlane.f32.xlu0 %v893
    %v895 = vpop.xlane.xlu0 %894
    %v896 = vsel %vm420, %v884, -inf
    %897 = vmax.xlane.f32.xlu0 %v896
    %v898 = vpop.xlane.xlu0 %897
    %v899 = vsel %vm420, %v885, -inf
    %900 = vmax.xlane.f32.xlu0 %v899
    %v901 = vpop.xlane.xlu0 %900
    %v902 = vsel %vm420, %v886, -inf
    %903 = vmax.xlane.f32.xlu0 %v902
    %v904 = vpop.xlane.xlu0 %903
    %v905 = vsel %vm420, %v887, -inf
    %906 = vmax.xlane.f32.xlu0 %v905
    %v907 = vpop.xlane.xlu0 %906
    %v908 = vsel %vm420, %v888, -inf
    %909 = vmax.xlane.f32.xlu0 %v908
    %v910 = vpop.xlane.xlu0 %909
    %v911 = vsel %vm420, %v889, -inf
    %912 = vmax.xlane.f32.xlu0 %v911
    %v913 = vpop.xlane.xlu0 %912
    %v914 = vsub.f32 %v882, %v892
    %v915 = vsub.f32 %v883, %v895
    %v916 = vsub.f32 %v884, %v898
    %v917 = vsub.f32 %v885, %v901
    %v918 = vsub.f32 %v886, %v904
    %v919 = vsub.f32 %v887, %v907
    %v920 = vsub.f32 %v888, %v910
    %v921 = vsub.f32 %v889, %v913
    %v922 = vmul.f32 %v914, 1.442695
    %v923 = vpow.pop %v922
    %v924 = vmul.f32 %v915, 1.442695
    %v925 = vpow.pop %v924
    %v926 = vmul.f32 %v916, 1.442695
    %v927 = vpow.pop %v926
    %v928 = vmul.f32 %v917, 1.442695
    %v929 = vpow.pop %v928
    %v930 = vmul.f32 %v918, 1.442695
    %v931 = vpow.pop %v930
    %v932 = vmul.f32 %v919, 1.442695
    %v933 = vpow.pop %v932
    %v934 = vmul.f32 %v920, 1.442695
    %v935 = vpow.pop %v934
    %v936 = vmul.f32 %v921, 1.442695
    %v937 = vpow.pop %v936
    %946 = vrot.lane.b32.xlu0 %v923, 96
    %v947 = vpop.permute.xlu0 %946
    %948 = vrot.lane.b32.xlu0 %v925, 96
    %v949 = vpop.permute.xlu0 %948
    %950 = vrot.lane.b32.xlu0 %v927, 96
    %v951 = vpop.permute.xlu0 %950
    %952 = vrot.lane.b32.xlu0 %v929, 96
    %v953 = vpop.permute.xlu0 %952
    %954 = vrot.lane.b32.xlu0 %v931, 96
    %v955 = vpop.permute.xlu0 %954
    %956 = vrot.lane.b32.xlu0 %v933, 96
    %v957 = vpop.permute.xlu0 %956
    %958 = vrot.lane.b32.xlu0 %v935, 96
    %v959 = vpop.permute.xlu0 %958
    %960 = vrot.lane.b32.xlu0 %v937, 96
    %v961 = vpop.permute.xlu0 %960
    %v970 = vsel %vm501, %v947, 0.0
    %971 = vadd.xlane.f32.xlu0 %v970
    %v972 = vpop.xlane.xlu0 %971
    %v973 = vsel %vm501, %v949, 0.0
    %974 = vadd.xlane.f32.xlu0 %v973
    %v975 = vpop.xlane.xlu0 %974
    %v976 = vsel %vm501, %v951, 0.0
    %977 = vadd.xlane.f32.xlu0 %v976
    %v978 = vpop.xlane.xlu0 %977
    %v979 = vsel %vm501, %v953, 0.0
    %980 = vadd.xlane.f32.xlu0 %v979
    %v981 = vpop.xlane.xlu0 %980
    %v982 = vsel %vm501, %v955, 0.0
    %983 = vadd.xlane.f32.xlu0 %v982
    %v984 = vpop.xlane.xlu0 %983
    %v985 = vsel %vm501, %v957, 0.0
    %986 = vadd.xlane.f32.xlu0 %v985
    %v987 = vpop.xlane.xlu0 %986
    %v988 = vsel %vm501, %v959, 0.0
    %989 = vadd.xlane.f32.xlu0 %v988
    %v990 = vpop.xlane.xlu0 %989
    %v991 = vsel %vm501, %v961, 0.0
    %992 = vadd.xlane.f32.xlu0 %v991
    %v993 = vpop.xlane.xlu0 %992
    %v994 = vrcp.pop %v972
    %v995 = vmul.f32 %v972, %v994
    %v996 = vsub.f32 1.0, %v995
    %v997 = vmul.f32 %v994, %v996
    %v998 = vadd.f32 %v994, %v997
    %vm999 = vweird.f32 %v972
    %vm1000 = vweird.f32 %v994
    %vm1001 = vmor %vm999, %vm1000
    %v1002 = vsel %vm1001, %v994, %v998
    %v1003 = vand.u32 2147483647, %v972
    %vm1004 = vcmp.eq.f32.partialorder %v1003, 8.507059e+37
    %v1005 = vand.u32 %v972, 2147483648
    %v1006 = vor.u32 1.1754944e-38, %v1005
    %v1007 = vsel %vm1004, %v1006, %v1002
    %v1008 = vrcp.pop %v975
    %v1009 = vmul.f32 %v975, %v1008
    %v1010 = vsub.f32 1.0, %v1009
    %v1011 = vmul.f32 %v1008, %v1010
    %v1012 = vadd.f32 %v1008, %v1011
    %vm1013 = vweird.f32 %v975
    %vm1014 = vweird.f32 %v1008
    %vm1015 = vmor %vm1013, %vm1014
    %v1016 = vsel %vm1015, %v1008, %v1012
    %v1017 = vand.u32 2147483647, %v975
    %vm1018 = vcmp.eq.f32.partialorder %v1017, 8.507059e+37
    %v1019 = vand.u32 %v975, 2147483648
    %v1020 = vor.u32 1.1754944e-38, %v1019
    %v1021 = vsel %vm1018, %v1020, %v1016
    %v1022 = vrcp.pop %v978
    %v1023 = vmul.f32 %v978, %v1022
    %v1024 = vsub.f32 1.0, %v1023
    %v1025 = vmul.f32 %v1022, %v1024
    %v1026 = vadd.f32 %v1022, %v1025
    %vm1027 = vweird.f32 %v978
    %vm1028 = vweird.f32 %v1022
    %vm1029 = vmor %vm1027, %vm1028
    %v1030 = vsel %vm1029, %v1022, %v1026
    %v1031 = vand.u32 2147483647, %v978
    %vm1032 = vcmp.eq.f32.partialorder %v1031, 8.507059e+37
    %v1033 = vand.u32 %v978, 2147483648
    %v1034 = vor.u32 1.1754944e-38, %v1033
    %v1035 = vsel %vm1032, %v1034, %v1030
    %v1036 = vrcp.pop %v981
    %v1037 = vmul.f32 %v981, %v1036
    %v1038 = vsub.f32 1.0, %v1037
    %v1039 = vmul.f32 %v1036, %v1038
    %v1040 = vadd.f32 %v1036, %v1039
    %vm1041 = vweird.f32 %v981
    %vm1042 = vweird.f32 %v1036
    %vm1043 = vmor %vm1041, %vm1042
    %v1044 = vsel %vm1043, %v1036, %v1040
    %v1045 = vand.u32 2147483647, %v981
    %vm1046 = vcmp.eq.f32.partialorder %v1045, 8.507059e+37
    %v1047 = vand.u32 %v981, 2147483648
    %v1048 = vor.u32 1.1754944e-38, %v1047
    %v1049 = vsel %vm1046, %v1048, %v1044
    %v1050 = vrcp.pop %v984
    %v1051 = vmul.f32 %v984, %v1050
    %v1052 = vsub.f32 1.0, %v1051
    %v1053 = vmul.f32 %v1050, %v1052
    %v1054 = vadd.f32 %v1050, %v1053
    %vm1055 = vweird.f32 %v984
    %vm1056 = vweird.f32 %v1050
    %vm1057 = vmor %vm1055, %vm1056
    %v1058 = vsel %vm1057, %v1050, %v1054
    %v1059 = vand.u32 2147483647, %v984
    %vm1060 = vcmp.eq.f32.partialorder %v1059, 8.507059e+37
    %v1061 = vand.u32 %v984, 2147483648
    %v1062 = vor.u32 1.1754944e-38, %v1061
    %v1063 = vsel %vm1060, %v1062, %v1058
    %v1064 = vrcp.pop %v987
    %v1065 = vmul.f32 %v987, %v1064
    %v1066 = vsub.f32 1.0, %v1065
    %v1067 = vmul.f32 %v1064, %v1066
    %v1068 = vadd.f32 %v1064, %v1067
    %vm1069 = vweird.f32 %v987
    %vm1070 = vweird.f32 %v1064
    %vm1071 = vmor %vm1069, %vm1070
    %v1072 = vsel %vm1071, %v1064, %v1068
    %v1073 = vand.u32 2147483647, %v987
    %vm1074 = vcmp.eq.f32.partialorder %v1073, 8.507059e+37
    %v1075 = vand.u32 %v987, 2147483648
    %v1076 = vor.u32 1.1754944e-38, %v1075
    %v1077 = vsel %vm1074, %v1076, %v1072
    %v1078 = vrcp.pop %v990
    %v1079 = vmul.f32 %v990, %v1078
    %v1080 = vsub.f32 1.0, %v1079
    %v1081 = vmul.f32 %v1078, %v1080
    %v1082 = vadd.f32 %v1078, %v1081
    %vm1083 = vweird.f32 %v990
    %vm1084 = vweird.f32 %v1078
    %vm1085 = vmor %vm1083, %vm1084
    %v1086 = vsel %vm1085, %v1078, %v1082
    %v1087 = vand.u32 2147483647, %v990
    %vm1088 = vcmp.eq.f32.partialorder %v1087, 8.507059e+37
    %v1089 = vand.u32 %v990, 2147483648
    %v1090 = vor.u32 1.1754944e-38, %v1089
    %v1091 = vsel %vm1088, %v1090, %v1086
    %v1092 = vrcp.pop %v993
    %v1093 = vmul.f32 %v993, %v1092
    %v1094 = vsub.f32 1.0, %v1093
    %v1095 = vmul.f32 %v1092, %v1094
    %v1096 = vadd.f32 %v1092, %v1095
    %vm1097 = vweird.f32 %v993
    %vm1098 = vweird.f32 %v1092
    %vm1099 = vmor %vm1097, %vm1098
    %v1100 = vsel %vm1099, %v1092, %v1096
    %v1101 = vand.u32 2147483647, %v993
    %vm1102 = vcmp.eq.f32.partialorder %v1101, 8.507059e+37
    %v1103 = vand.u32 %v993, 2147483648
    %v1104 = vor.u32 1.1754944e-38, %v1103
    %v1105 = vsel %vm1102, %v1104, %v1100
    %v1106 = vmul.f32 %v923, %v1007
    %v1107 = vmul.f32 %v925, %v1021
    %v1108 = vmul.f32 %v927, %v1035
    %v1109 = vmul.f32 %v929, %v1049
    %v1110 = vmul.f32 %v931, %v1063
    %v1111 = vmul.f32 %v933, %v1077
    %v1112 = vmul.f32 %v935, %v1091
    %v1113 = vmul.f32 %v937, %v1105
    %s1114 = sld [smem:[#allocation2 + $0x3]]
    %v1115 = vstv %s1114
    %v1116 = vmul.f32 %v402, %v1115
    %v1117 = vmul.f32 %v403, %v1115
    %v1118 = vmul.f32 %v404, %v1115
    %v1119 = vmul.f32 %v405, %v1115
    %v1120 = vmul.f32 %v406, %v1115
    %v1121 = vmul.f32 %v407, %v1115
    %v1122 = vmul.f32 %v408, %v1115
    %v1123 = vmul.f32 %v409, %v1115
    %v1124 = vsel %vm420, %v1116, -inf
    %1125 = vmax.xlane.f32.xlu0 %v1124
    %v1126 = vpop.xlane.xlu0 %1125
    %v1127 = vsel %vm420, %v1117, -inf
    %1128 = vmax.xlane.f32.xlu0 %v1127
    %v1129 = vpop.xlane.xlu0 %1128
    %v1130 = vsel %vm420, %v1118, -inf
    %1131 = vmax.xlane.f32.xlu0 %v1130
    %v1132 = vpop.xlane.xlu0 %1131
    %v1133 = vsel %vm420, %v1119, -inf
    %1134 = vmax.xlane.f32.xlu0 %v1133
    %v1135 = vpop.xlane.xlu0 %1134
    %v1136 = vsel %vm420, %v1120, -inf
    %1137 = vmax.xlane.f32.xlu0 %v1136
    %v1138 = vpop.xlane.xlu0 %1137
    %v1139 = vsel %vm420, %v1121, -inf
    %1140 = vmax.xlane.f32.xlu0 %v1139
    %v1141 = vpop.xlane.xlu0 %1140
    %v1142 = vsel %vm420, %v1122, -inf
    %1143 = vmax.xlane.f32.xlu0 %v1142
    %v1144 = vpop.xlane.xlu0 %1143
    %v1145 = vsel %vm420, %v1123, -inf
    %1146 = vmax.xlane.f32.xlu0 %v1145
    %v1147 = vpop.xlane.xlu0 %1146
    %v1148 = vsub.f32 %v1116, %v1126
    %v1149 = vsub.f32 %v1117, %v1129
    %v1150 = vsub.f32 %v1118, %v1132
    %v1151 = vsub.f32 %v1119, %v1135
    %v1152 = vsub.f32 %v1120, %v1138
    %v1153 = vsub.f32 %v1121, %v1141
    %v1154 = vsub.f32 %v1122, %v1144
    %v1155 = vsub.f32 %v1123, %v1147
    %v1156 = vmul.f32 %v1148, 1.442695
    %v1157 = vpow.pop %v1156
    %v1158 = vmul.f32 %v1149, 1.442695
    %v1159 = vpow.pop %v1158
    %v1160 = vmul.f32 %v1150, 1.442695
    %v1161 = vpow.pop %v1160
    %v1162 = vmul.f32 %v1151, 1.442695
    %v1163 = vpow.pop %v1162
    %v1164 = vmul.f32 %v1152, 1.442695
    %v1165 = vpow.pop %v1164
    %v1166 = vmul.f32 %v1153, 1.442695
    %v1167 = vpow.pop %v1166
    %v1168 = vmul.f32 %v1154, 1.442695
    %v1169 = vpow.pop %v1168
    %v1170 = vmul.f32 %v1155, 1.442695
    %v1171 = vpow.pop %v1170
    %1180 = vrot.lane.b32.xlu0 %v1157, 96
    %v1181 = vpop.permute.xlu0 %1180
    %1182 = vrot.lane.b32.xlu0 %v1159, 96
    %v1183 = vpop.permute.xlu0 %1182
    %1184 = vrot.lane.b32.xlu0 %v1161, 96
    %v1185 = vpop.permute.xlu0 %1184
    %1186 = vrot.lane.b32.xlu0 %v1163, 96
    %v1187 = vpop.permute.xlu0 %1186
    %1188 = vrot.lane.b32.xlu0 %v1165, 96
    %v1189 = vpop.permute.xlu0 %1188
    %1190 = vrot.lane.b32.xlu0 %v1167, 96
    %v1191 = vpop.permute.xlu0 %1190
    %1192 = vrot.lane.b32.xlu0 %v1169, 96
    %v1193 = vpop.permute.xlu0 %1192
    %1194 = vrot.lane.b32.xlu0 %v1171, 96
    %v1195 = vpop.permute.xlu0 %1194
    %v1204 = vsel %vm501, %v1181, 0.0
    %1205 = vadd.xlane.f32.xlu0 %v1204
    %v1206 = vpop.xlane.xlu0 %1205
    %v1207 = vsel %vm501, %v1183, 0.0
    %1208 = vadd.xlane.f32.xlu0 %v1207
    %v1209 = vpop.xlane.xlu0 %1208
    %v1210 = vsel %vm501, %v1185, 0.0
    %1211 = vadd.xlane.f32.xlu0 %v1210
    %v1212 = vpop.xlane.xlu0 %1211
    %v1213 = vsel %vm501, %v1187, 0.0
    %1214 = vadd.xlane.f32.xlu0 %v1213
    %v1215 = vpop.xlane.xlu0 %1214
    %v1216 = vsel %vm501, %v1189, 0.0
    %1217 = vadd.xlane.f32.xlu0 %v1216
    %v1218 = vpop.xlane.xlu0 %1217
    %v1219 = vsel %vm501, %v1191, 0.0
    %1220 = vadd.xlane.f32.xlu0 %v1219
    %v1221 = vpop.xlane.xlu0 %1220
    %v1222 = vsel %vm501, %v1193, 0.0
    %1223 = vadd.xlane.f32.xlu0 %v1222
    %v1224 = vpop.xlane.xlu0 %1223
    %v1225 = vsel %vm501, %v1195, 0.0
    %1226 = vadd.xlane.f32.xlu0 %v1225
    %v1227 = vpop.xlane.xlu0 %1226
    %v1228 = vrcp.pop %v1206
    %v1229 = vmul.f32 %v1206, %v1228
    %v1230 = vsub.f32 1.0, %v1229
    %v1231 = vmul.f32 %v1228, %v1230
    %v1232 = vadd.f32 %v1228, %v1231
    %vm1233 = vweird.f32 %v1206
    %vm1234 = vweird.f32 %v1228
    %vm1235 = vmor %vm1233, %vm1234
    %v1236 = vsel %vm1235, %v1228, %v1232
    %v1237 = vand.u32 2147483647, %v1206
    %vm1238 = vcmp.eq.f32.partialorder %v1237, 8.507059e+37
    %v1239 = vand.u32 %v1206, 2147483648
    %v1240 = vor.u32 1.1754944e-38, %v1239
    %v1241 = vsel %vm1238, %v1240, %v1236
    %v1242 = vrcp.pop %v1209
    %v1243 = vmul.f32 %v1209, %v1242
    %v1244 = vsub.f32 1.0, %v1243
    %v1245 = vmul.f32 %v1242, %v1244
    %v1246 = vadd.f32 %v1242, %v1245
    %vm1247 = vweird.f32 %v1209
    %vm1248 = vweird.f32 %v1242
    %vm1249 = vmor %vm1247, %vm1248
    %v1250 = vsel %vm1249, %v1242, %v1246
    %v1251 = vand.u32 2147483647, %v1209
    %vm1252 = vcmp.eq.f32.partialorder %v1251, 8.507059e+37
    %v1253 = vand.u32 %v1209, 2147483648
    %v1254 = vor.u32 1.1754944e-38, %v1253
    %v1255 = vsel %vm1252, %v1254, %v1250
    %v1256 = vrcp.pop %v1212
    %v1257 = vmul.f32 %v1212, %v1256
    %v1258 = vsub.f32 1.0, %v1257
    %v1259 = vmul.f32 %v1256, %v1258
    %v1260 = vadd.f32 %v1256, %v1259
    %vm1261 = vweird.f32 %v1212
    %vm1262 = vweird.f32 %v1256
    %vm1263 = vmor %vm1261, %vm1262
    %v1264 = vsel %vm1263, %v1256, %v1260
    %v1265 = vand.u32 2147483647, %v1212
    %vm1266 = vcmp.eq.f32.partialorder %v1265, 8.507059e+37
    %v1267 = vand.u32 %v1212, 2147483648
    %v1268 = vor.u32 1.1754944e-38, %v1267
    %v1269 = vsel %vm1266, %v1268, %v1264
    %v1270 = vrcp.pop %v1215
    %v1271 = vmul.f32 %v1215, %v1270
    %v1272 = vsub.f32 1.0, %v1271
    %v1273 = vmul.f32 %v1270, %v1272
    %v1274 = vadd.f32 %v1270, %v1273
    %vm1275 = vweird.f32 %v1215
    %vm1276 = vweird.f32 %v1270
    %vm1277 = vmor %vm1275, %vm1276
    %v1278 = vsel %vm1277, %v1270, %v1274
    %v1279 = vand.u32 2147483647, %v1215
    %vm1280 = vcmp.eq.f32.partialorder %v1279, 8.507059e+37
    %v1281 = vand.u32 %v1215, 2147483648
    %v1282 = vor.u32 1.1754944e-38, %v1281
    %v1283 = vsel %vm1280, %v1282, %v1278
    %v1284 = vrcp.pop %v1218
    %v1285 = vmul.f32 %v1218, %v1284
    %v1286 = vsub.f32 1.0, %v1285
    %v1287 = vmul.f32 %v1284, %v1286
    %v1288 = vadd.f32 %v1284, %v1287
    %vm1289 = vweird.f32 %v1218
    %vm1290 = vweird.f32 %v1284
    %vm1291 = vmor %vm1289, %vm1290
    %v1292 = vsel %vm1291, %v1284, %v1288
    %v1293 = vand.u32 2147483647, %v1218
    %vm1294 = vcmp.eq.f32.partialorder %v1293, 8.507059e+37
    %v1295 = vand.u32 %v1218, 2147483648
    %v1296 = vor.u32 1.1754944e-38, %v1295
    %v1297 = vsel %vm1294, %v1296, %v1292
    %v1298 = vrcp.pop %v1221
    %v1299 = vmul.f32 %v1221, %v1298
    %v1300 = vsub.f32 1.0, %v1299
    %v1301 = vmul.f32 %v1298, %v1300
    %v1302 = vadd.f32 %v1298, %v1301
    %vm1303 = vweird.f32 %v1221
    %vm1304 = vweird.f32 %v1298
    %vm1305 = vmor %vm1303, %vm1304
    %v1306 = vsel %vm1305, %v1298, %v1302
    %v1307 = vand.u32 2147483647, %v1221
    %vm1308 = vcmp.eq.f32.partialorder %v1307, 8.507059e+37
    %v1309 = vand.u32 %v1221, 2147483648
    %v1310 = vor.u32 1.1754944e-38, %v1309
    %v1311 = vsel %vm1308, %v1310, %v1306
    %v1312 = vrcp.pop %v1224
    %v1313 = vmul.f32 %v1224, %v1312
    %v1314 = vsub.f32 1.0, %v1313
    %v1315 = vmul.f32 %v1312, %v1314
    %v1316 = vadd.f32 %v1312, %v1315
    %vm1317 = vweird.f32 %v1224
    %vm1318 = vweird.f32 %v1312
    %vm1319 = vmor %vm1317, %vm1318
    %v1320 = vsel %vm1319, %v1312, %v1316
    %v1321 = vand.u32 2147483647, %v1224
    %vm1322 = vcmp.eq.f32.partialorder %v1321, 8.507059e+37
    %v1323 = vand.u32 %v1224, 2147483648
    %v1324 = vor.u32 1.1754944e-38, %v1323
    %v1325 = vsel %vm1322, %v1324, %v1320
    %v1326 = vrcp.pop %v1227
    %v1327 = vmul.f32 %v1227, %v1326
    %v1328 = vsub.f32 1.0, %v1327
    %v1329 = vmul.f32 %v1326, %v1328
    %v1330 = vadd.f32 %v1326, %v1329
    %vm1331 = vweird.f32 %v1227
    %vm1332 = vweird.f32 %v1326
    %vm1333 = vmor %vm1331, %vm1332
    %v1334 = vsel %vm1333, %v1326, %v1330
    %v1335 = vand.u32 2147483647, %v1227
    %vm1336 = vcmp.eq.f32.partialorder %v1335, 8.507059e+37
    %v1337 = vand.u32 %v1227, 2147483648
    %v1338 = vor.u32 1.1754944e-38, %v1337
    %v1339 = vsel %vm1336, %v1338, %v1334
    %v1340 = vmul.f32 %v1157, %v1241
    %v1341 = vmul.f32 %v1159, %v1255
    %v1342 = vmul.f32 %v1161, %v1269
    %v1343 = vmul.f32 %v1163, %v1283
    %v1344 = vmul.f32 %v1165, %v1297
    %v1345 = vmul.f32 %v1167, %v1311
    %v1346 = vmul.f32 %v1169, %v1325
    %v1347 = vmul.f32 %v1171, %v1339
    %1356 = vrot.lane.b32.xlu0 %v638, 96
    %v1357 = vpop.permute.xlu0 %1356
    %1358 = vrot.lane.b32.xlu0 %v639, 96
    %v1359 = vpop.permute.xlu0 %1358
    %1360 = vrot.lane.b32.xlu0 %v640, 96
    %v1361 = vpop.permute.xlu0 %1360
    %1362 = vrot.lane.b32.xlu0 %v641, 96
    %v1363 = vpop.permute.xlu0 %1362
    %1364 = vrot.lane.b32.xlu0 %v642, 96
    %v1365 = vpop.permute.xlu0 %1364
    %1366 = vrot.lane.b32.xlu0 %v643, 96
    %v1367 = vpop.permute.xlu0 %1366
    %1368 = vrot.lane.b32.xlu0 %v644, 96
    %v1369 = vpop.permute.xlu0 %1368
    %1370 = vrot.lane.b32.xlu0 %v645, 96
    %v1371 = vpop.permute.xlu0 %1370
    %1388 = vrot.lane.b32.xlu0 %v1106, 32
    %v1389 = vpop.permute.xlu0 %1388
    %1390 = vrot.lane.b32.xlu0 %v1107, 32
    %v1391 = vpop.permute.xlu0 %1390
    %1392 = vrot.lane.b32.xlu0 %v1108, 32
    %v1393 = vpop.permute.xlu0 %1392
    %1394 = vrot.lane.b32.xlu0 %v1109, 32
    %v1395 = vpop.permute.xlu0 %1394
    %1396 = vrot.lane.b32.xlu0 %v1110, 32
    %v1397 = vpop.permute.xlu0 %1396
    %1398 = vrot.lane.b32.xlu0 %v1111, 32
    %v1399 = vpop.permute.xlu0 %1398
    %1400 = vrot.lane.b32.xlu0 %v1112, 32
    %v1401 = vpop.permute.xlu0 %1400
    %1402 = vrot.lane.b32.xlu0 %v1113, 32
    %v1403 = vpop.permute.xlu0 %1402
    %1420 = vrot.lane.b32.xlu0 %v1340, 64
    %v1421 = vpop.permute.xlu0 %1420
    %1422 = vrot.lane.b32.xlu0 %v1341, 64
    %v1423 = vpop.permute.xlu0 %1422
    %1424 = vrot.lane.b32.xlu0 %v1342, 64
    %v1425 = vpop.permute.xlu0 %1424
    %1426 = vrot.lane.b32.xlu0 %v1343, 64
    %v1427 = vpop.permute.xlu0 %1426
    %1428 = vrot.lane.b32.xlu0 %v1344, 64
    %v1429 = vpop.permute.xlu0 %1428
    %1430 = vrot.lane.b32.xlu0 %v1345, 64
    %v1431 = vpop.permute.xlu0 %1430
    %1432 = vrot.lane.b32.xlu0 %v1346, 64
    %v1433 = vpop.permute.xlu0 %1432
    %1434 = vrot.lane.b32.xlu0 %v1347, 64
    %v1435 = vpop.permute.xlu0 %1434
    %v1444 = vsel %vm501, %v1357, %v872
    %v1445 = vsel %vm501, %v1359, %v873
    %v1446 = vsel %vm501, %v1361, %v874
    %v1447 = vsel %vm501, %v1363, %v875
    %v1448 = vsel %vm501, %v1365, %v876
    %v1449 = vsel %vm501, %v1367, %v877
    %v1450 = vsel %vm501, %v1369, %v878
    %v1451 = vsel %vm501, %v1371, %v879
    %vm1452 = vcmask 523264
    %v1453 = vsel %vm1452, %v1444, %v1389
    %v1454 = vsel %vm1452, %v1445, %v1391
    %v1455 = vsel %vm1452, %v1446, %v1393
    %v1456 = vsel %vm1452, %v1447, %v1395
    %v1457 = vsel %vm1452, %v1448, %v1397
    %v1458 = vsel %vm1452, %v1449, %v1399
    %v1459 = vsel %vm1452, %v1450, %v1401
    %v1460 = vsel %vm1452, %v1451, %v1403
    %vm1461 = vcmask 785408
    %v1462 = vsel %vm1461, %v1453, %v1421
    %v1463 = vsel %vm1461, %v1454, %v1423
    %v1464 = vsel %vm1461, %v1455, %v1425
    %v1465 = vsel %vm1461, %v1456, %v1427
    %v1466 = vsel %vm1461, %v1457, %v1429
    %v1467 = vsel %vm1461, %v1458, %v1431
    %v1468 = vsel %vm1461, %v1459, %v1433
    %v1469 = vsel %vm1461, %v1460, %v1435
    %1470 = vst [vmem:[#allocation5] sm:$0xff] %v1462
    %1471 = vst [vmem:[#allocation5 + $0x8] sm:$0xff] %v1463
    %1472 = vst [vmem:[#allocation5 + $0x10] sm:$0xff] %v1464
    %1473 = vst [vmem:[#allocation5 + $0x18] sm:$0xff] %v1465
    %1474 = vst [vmem:[#allocation5 + $0x20] sm:$0xff] %v1466
    %1475 = vst [vmem:[#allocation5 + $0x28] sm:$0xff] %v1467
    %1476 = vst [vmem:[#allocation5 + $0x30] sm:$0xff] %v1468
    %1477 = vst [vmem:[#allocation5 + $0x38] sm:$0xff] %v1469
    // Predicated region
    $region22: #{tpu_custom_call.1} parent=1 // pred_check
      _
    $region23: #{tpu_custom_call.1} parent=1 // pred_check_branch
      %1479 = sbr.rel (0) target = $region25
    $region24: #{tpu_custom_call.1} parent=1 // pred_region
      %1481 = vsyncadd [#allocation3], 0
      %s1482 = sshll.u32 [#allocation5], 4
      %s1483 = int_to_ptr.vmem [resolvable:$true] %s1482
      %s1484 = sshll.u32 %s4, 4
      %s1485 = int_to_ptr.hbm [resolvable:$true] %s1484
      %1490 = dma.vmem_to_hbm [thread:$0]  %s1483, 1024, %s1485, [#allocation3], 128, 128, 8
    $region25: #{tpu_custom_call.1} parent=1 // pred_fallthru
      _
    // Predicated region
    $region26: #{tpu_custom_call.1} parent=1 // pred_check
      _
    $region27: #{tpu_custom_call.1} parent=1 // pred_check_branch
      %1492 = sbr.rel (0) target = $region29
    $region28: #{tpu_custom_call.1} parent=1 // pred_region
      %1494 = dma.done [#allocation3], 1024
    $region29: #{tpu_custom_call.1} parent=1 // pred_fallthru
      _
    %1495 = vsyncpa [#allocation3], 1
    %1496 = vsyncpa [#allocation4], 1

</llo_original>
